<compile_context>
chip_gen: v5e
topology: v5e:2x2
jax: 0.10.0
libtpu: 0.0.40
codegen_flags: <defaults>
</compile_context>

<pallas_src>
from functools import partial

import jax
import jax.numpy as jnp
from jax.experimental import pallas as pl
from jax.experimental.pallas import tpu as pltpu


INPUT_DIM = 14        # module default
MAX_TILE_B = 4096     # batch tile (lane) width cap: multiple of 256 and 128


def _round_up(n, m):
    return ((n + m - 1) // m) * m


def _mlp_kernel(x_ref, w1_ref, b1_ref, w2_ref, b2_ref, w3_ref, b3_ref,
                w4_ref, b4_ref, o_ref):
    """One batch tile; all refs are feature-major ([features, tile_b]), f32."""
    x = x_ref[...]                                                    # (K_PAD, TB)

    # fc1 (K=16 contraction; MXU under-filled but cheaper than a VPU fallback)
    h = jnp.dot(w1_ref[...], x,
                preferred_element_type=jnp.float32) + b1_ref[...]    # (256, TB)
    h = jnp.maximum(h, 0.0)

    # fc2
    h = jnp.dot(w2_ref[...], h,
                preferred_element_type=jnp.float32) + b2_ref[...]    # (256, TB)
    h = jnp.maximum(h, 0.0)

    # fc3
    h = jnp.dot(w3_ref[...], h,
                preferred_element_type=jnp.float32) + b3_ref[...]    # (128, TB)
    h = jnp.maximum(h, 0.0)

    # fc4 (128 -> 1): VPU broadcast-multiply + sublane reduction.
    # Result is a lane-dense (1, TB) row -> unmasked stores / dense writeback.
    o_ref[...] = jnp.sum(h * w4_ref[...], axis=0, keepdims=True) + b4_ref[...]


@partial(jax.jit, static_argnames=("max_tile_b",))
def hamiltonian_network_quadruped(coords, params, *, max_tile_b=MAX_TILE_B):
    """coords: (..., 14) float32 -> (...,) float32, matching the PyTorch module."""
    w1, b1, w2, b2, w3, b3, w4, b4 = params

    orig_lead = coords.shape[:-1]
    x = coords.reshape(-1, coords.shape[-1]).astype(jnp.float32)      # (B, in_dim)
    B, in_dim = x.shape
    n_feat = in_dim + 1                                               # cos, sin, rest
    k_pad = _round_up(n_feat, 8)                                      # 15 -> 16

    # --- feature prep, fused into the single layout-transposition op --------
    ang = x[:, 0]
    feats_t = jnp.concatenate(
        [jnp.cos(ang)[None, :],
         jnp.sin(ang)[None, :],
         x[:, 1:].T,
         jnp.zeros((k_pad - n_feat, B), jnp.float32)], axis=0)        # (k_pad, B)

    # --- weight prep: transpose to [out, in], pad fc1 K, keep f32 -----------
    w1k = jnp.concatenate(
        [w1.T, jnp.zeros((w1.shape[1], k_pad - w1.shape[0]), jnp.float32)],
        axis=1).astype(jnp.float32)                                   # (256, k_pad)
    b1k = b1.reshape(-1, 1).astype(jnp.float32)                       # (256, 1)
    w2k = w2.T.astype(jnp.float32)                                    # (256, 256)
    b2k = b2.reshape(-1, 1).astype(jnp.float32)                       # (256, 1)
    w3k = w3.T.astype(jnp.float32)                                    # (128, 256)
    b3k = b3.reshape(-1, 1).astype(jnp.float32)                       # (128, 1)
    w4k = w4.astype(jnp.float32)                                      # (128, 1) VPU
    b4k = b4.reshape(1, 1).astype(jnp.float32)                        # (1, 1)

    # Batch tile: large to amortize per-step overhead, multiple of 256 (MXU N
    # width on v6e/v7x), split >= 2 ways when B allows so both v7x TCs get a
    # grid step.  Weights/biases use constant index maps -> VMEM-resident.
    tile_b = min(max_tile_b, _round_up(pl.cdiv(B, 2), 256))
    grid = (pl.cdiv(B, tile_b),)
    const = lambda i: (0, 0)

    out = pl.pallas_call(
        _mlp_kernel,
        out_shape=jax.ShapeDtypeStruct((1, B), jnp.float32),
        grid=grid,
        in_specs=[
            pl.BlockSpec((k_pad, tile_b), lambda i: (0, i)),
            pl.BlockSpec(w1k.shape, const), pl.BlockSpec(b1k.shape, const),
            pl.BlockSpec(w2k.shape, const), pl.BlockSpec(b2k.shape, const),
            pl.BlockSpec(w3k.shape, const), pl.BlockSpec(b3k.shape, const),
            pl.BlockSpec(w4k.shape, const), pl.BlockSpec(b4k.shape, const),
        ],
        out_specs=pl.BlockSpec((1, tile_b), lambda i: (0, i)),
        compiler_params=pltpu.CompilerParams(
            dimension_semantics=("parallel",),
            vmem_limit_bytes=32 * 1024 * 1024),
    )(feats_t, w1k, b1k, w2k, b2k, w3k, b3k, w4k, b4k)

    # squeeze(-1) equivalent + restore original leading dims
    return out.reshape(orig_lead)


def init_params(key, input_dim=INPUT_DIM):
    """Deterministic synthetic parameters (shapes match the nn.Module)."""
    dims = [(input_dim + 1, 256), (256, 256), (256, 128), (128, 1)]
    params = []
    for din, dout in dims:
        kw, kb, key = jax.random.split(key, 3)
        bound = 1.0 / jnp.sqrt(jnp.float32(din))   # PyTorch-Linear-style range
        w = jax.random.uniform(kw, (din, dout), jnp.float32, -bound, bound)
        b = jax.random.uniform(kb, (1, dout), jnp.float32, -bound, bound)
        params += [w, b]
    return tuple(params)


def _reference_forward(coords, params):
    """Pure-JAX f32 reference mirroring the PyTorch module, for validation."""
    w1, b1, w2, b2, w3, b3, w4, b4 = params
    cos = jnp.cos(coords[..., 0][..., None])
    sin = jnp.sin(coords[..., 0][..., None])
    x = jnp.concatenate([cos, sin, coords[..., 1:]], axis=-1)
    x = jax.nn.relu(x @ w1 + b1[0])
    x = jax.nn.relu(x @ w2 + b2[0])
    x = jax.nn.relu(x @ w3 + b3[0])
    x = x @ w4 + b4[0]
    return x[..., 0]


if __name__ == "__main__":
    key = jax.random.PRNGKey(0)
    k_params, k_in1, k_in2 = jax.random.split(key, 3)

    params = init_params(k_params, INPUT_DIM)

    # Small input consistent with the module: arbitrary leading dims, last = 14.
    coords = jax.random.normal(k_in1, (2, 8, INPUT_DIM), dtype=jnp.float32)
    out = jax.block_until_ready(hamiltonian_network_quadruped(coords, params))
    ref = _reference_forward(coords, params)
    assert out.shape == coords.shape[:-1], (out.shape, coords.shape[:-1])
    # Loose tolerance covers MXU default-precision dots in the pure-JAX
    # reference on real TPUs; in interpret mode both sides are exact f32.
    assert jnp.allclose(out, ref, atol=2e-2, rtol=2e-2), "mismatch vs reference"

    # Ragged multi-step grid check: B=600 with a 256-wide tile -> 3 grid steps,
    # last one partial (exercises output masking for B not a multiple of tile).
    coords2 = jax.random.normal(k_in2, (600, INPUT_DIM), dtype=jnp.float32)
    out2 = jax.block_until_ready(
        hamiltonian_network_quadruped(coords2, params, max_tile_b=256))
    ref2 = _reference_forward(coords2, params)
    assert out2.shape == (600,), out2.shape
    assert jnp.allclose(out2, ref2, atol=2e-2, rtol=2e-2), "ragged mismatch"

    print("KERNEL_OK")
</pallas_src>

<mosaic_0001>
module attributes {stable_mosaic.version = 11 : i64} {
  func.func @_mlp_kernel(%arg0: i32, %arg1: memref<16x256xf32, #tpu.memory_space<vmem>>, %arg2: memref<256x16xf32, #tpu.memory_space<vmem>>, %arg3: memref<256x1xf32, #tpu.memory_space<vmem>>, %arg4: memref<256x256xf32, #tpu.memory_space<vmem>>, %arg5: memref<256x1xf32, #tpu.memory_space<vmem>>, %arg6: memref<128x256xf32, #tpu.memory_space<vmem>>, %arg7: memref<128x1xf32, #tpu.memory_space<vmem>>, %arg8: memref<128x1xf32, #tpu.memory_space<vmem>>, %arg9: memref<1x1xf32, #tpu.memory_space<vmem>>, %arg10: memref<1x256xf32, #tpu.memory_space<vmem>>) attributes {dimension_semantics = [#tpu.dimension_semantics<parallel>], iteration_bounds = array<i64: 1>, scalar_prefetch = 0 : i64, scratch_operands = 0 : i64, tpu.core_type = #tpu.core_type<tc>, window_params = [{transform_indices = @transform_0, window_bounds = array<i64: 16, 256>}, {pipeline_mode = #tpu.pipeline_mode<synchronous>, transform_indices = @transform_1, window_bounds = array<i64: 256, 16>}, {pipeline_mode = #tpu.pipeline_mode<synchronous>, transform_indices = @transform_2, window_bounds = array<i64: 256, 1>}, {pipeline_mode = #tpu.pipeline_mode<synchronous>, transform_indices = @transform_3, window_bounds = array<i64: 256, 256>}, {pipeline_mode = #tpu.pipeline_mode<synchronous>, transform_indices = @transform_4, window_bounds = array<i64: 256, 1>}, {pipeline_mode = #tpu.pipeline_mode<synchronous>, transform_indices = @transform_5, window_bounds = array<i64: 128, 256>}, {pipeline_mode = #tpu.pipeline_mode<synchronous>, transform_indices = @transform_6, window_bounds = array<i64: 128, 1>}, {pipeline_mode = #tpu.pipeline_mode<synchronous>, transform_indices = @transform_7, window_bounds = array<i64: 128, 1>}, {pipeline_mode = #tpu.pipeline_mode<synchronous>, transform_indices = @transform_8, window_bounds = array<i64: 1, 1>}, {transform_indices = @transform_9, window_bounds = array<i64: 1, 256>}]} {
    %c0 = arith.constant 0 : index
    %c0_0 = arith.constant 0 : index
    %0 = vector.load %arg1[%c0, %c0_0] : memref<16x256xf32, #tpu.memory_space<vmem>>, vector<16x256xf32>
    %c0_1 = arith.constant 0 : index
    %c0_2 = arith.constant 0 : index
    %1 = vector.load %arg2[%c0_1, %c0_2] : memref<256x16xf32, #tpu.memory_space<vmem>>, vector<256x16xf32>
    %cst = arith.constant dense<0.000000e+00> : vector<256x256xf32>
    %2 = tpu.matmul %1, %0, %cst {dimension_numbers = #tpu.dot_dimension_numbers<[1], [0], [0], [1], [0, 0, 1, 1], [], []>} : vector<256x16xf32>, vector<16x256xf32>, vector<256x256xf32> -> vector<256x256xf32>
    %c0_3 = arith.constant 0 : index
    %c0_4 = arith.constant 0 : index
    %3 = vector.load %arg3[%c0_3, %c0_4] : memref<256x1xf32, #tpu.memory_space<vmem>>, vector<256x1xf32>
    %4 = vector.broadcast %3 : vector<256x1xf32> to vector<256x256xf32>
    %5 = arith.addf %2, %4 : vector<256x256xf32>
    %cst_5 = arith.constant 0.000000e+00 : f32
    %6 = vector.broadcast %cst_5 : f32 to vector<256x256xf32>
    %7 = arith.maximumf %5, %6 : vector<256x256xf32>
    %c0_6 = arith.constant 0 : index
    %c0_7 = arith.constant 0 : index
    %8 = vector.load %arg4[%c0_6, %c0_7] : memref<256x256xf32, #tpu.memory_space<vmem>>, vector<256x256xf32>
    %cst_8 = arith.constant dense<0.000000e+00> : vector<256x256xf32>
    %9 = tpu.matmul %8, %7, %cst_8 {dimension_numbers = #tpu.dot_dimension_numbers<[1], [0], [0], [1], [0, 0, 1, 1], [], []>} : vector<256x256xf32>, vector<256x256xf32>, vector<256x256xf32> -> vector<256x256xf32>
    %c0_9 = arith.constant 0 : index
    %c0_10 = arith.constant 0 : index
    %10 = vector.load %arg5[%c0_9, %c0_10] : memref<256x1xf32, #tpu.memory_space<vmem>>, vector<256x1xf32>
    %11 = vector.broadcast %10 : vector<256x1xf32> to vector<256x256xf32>
    %12 = arith.addf %9, %11 : vector<256x256xf32>
    %cst_11 = arith.constant 0.000000e+00 : f32
    %13 = vector.broadcast %cst_11 : f32 to vector<256x256xf32>
    %14 = arith.maximumf %12, %13 : vector<256x256xf32>
    %c0_12 = arith.constant 0 : index
    %c0_13 = arith.constant 0 : index
    %15 = vector.load %arg6[%c0_12, %c0_13] : memref<128x256xf32, #tpu.memory_space<vmem>>, vector<128x256xf32>
    %cst_14 = arith.constant dense<0.000000e+00> : vector<128x256xf32>
    %16 = tpu.matmul %15, %14, %cst_14 {dimension_numbers = #tpu.dot_dimension_numbers<[1], [0], [0], [1], [0, 0, 1, 1], [], []>} : vector<128x256xf32>, vector<256x256xf32>, vector<128x256xf32> -> vector<128x256xf32>
    %c0_15 = arith.constant 0 : index
    %c0_16 = arith.constant 0 : index
    %17 = vector.load %arg7[%c0_15, %c0_16] : memref<128x1xf32, #tpu.memory_space<vmem>>, vector<128x1xf32>
    %18 = vector.broadcast %17 : vector<128x1xf32> to vector<128x256xf32>
    %19 = arith.addf %16, %18 : vector<128x256xf32>
    %cst_17 = arith.constant 0.000000e+00 : f32
    %20 = vector.broadcast %cst_17 : f32 to vector<128x256xf32>
    %21 = arith.maximumf %19, %20 : vector<128x256xf32>
    %c0_18 = arith.constant 0 : index
    %c0_19 = arith.constant 0 : index
    %22 = vector.load %arg8[%c0_18, %c0_19] : memref<128x1xf32, #tpu.memory_space<vmem>>, vector<128x1xf32>
    %23 = vector.broadcast %22 : vector<128x1xf32> to vector<128x256xf32>
    %24 = arith.mulf %21, %23 : vector<128x256xf32>
    %cst_20 = arith.constant dense<0.000000e+00> : vector<256xf32>
    %25 = vector.multi_reduction <add>, %24, %cst_20 [0] : vector<128x256xf32> to vector<256xf32>
    %26 = vector.shape_cast %25 : vector<256xf32> to vector<1x256xf32>
    %c0_21 = arith.constant 0 : index
    %c0_22 = arith.constant 0 : index
    %27 = vector.load %arg9[%c0_21, %c0_22] : memref<1x1xf32, #tpu.memory_space<vmem>>, vector<1x1xf32>
    %28 = vector.broadcast %27 : vector<1x1xf32> to vector<1x256xf32>
    %29 = arith.addf %26, %28 : vector<1x256xf32>
    %c0_23 = arith.constant 0 : index
    %c0_24 = arith.constant 0 : index
    %30 = vector.load %arg10[%c0_23, %c0_24] : memref<1x256xf32, #tpu.memory_space<vmem>>, vector<1x256xf32>
    tpu.vector_store %arg10[%c0_23, %c0_24], %29 {strides = array<i32>} : memref<1x256xf32, #tpu.memory_space<vmem>>, vector<1x256xf32>,
    return
  }
  func.func @transform_0(%arg0: i32) -> (i32, i32) {
    %c0_i32 = arith.constant 0 : i32
    %c0_i32_0 = arith.constant 0 : i32
    return %c0_i32, %arg0 : i32, i32
  }
  func.func @transform_1(%arg0: i32) -> (i32, i32) {
    %c0_i32 = arith.constant 0 : i32
    %c0_i32_0 = arith.constant 0 : i32
    %c0_i32_1 = arith.constant 0 : i32
    return %c0_i32, %c0_i32_0 : i32, i32
  }
  func.func @transform_2(%arg0: i32) -> (i32, i32) {
    %c0_i32 = arith.constant 0 : i32
    %c0_i32_0 = arith.constant 0 : i32
    %c0_i32_1 = arith.constant 0 : i32
    return %c0_i32, %c0_i32_0 : i32, i32
  }
  func.func @transform_3(%arg0: i32) -> (i32, i32) {
    %c0_i32 = arith.constant 0 : i32
    %c0_i32_0 = arith.constant 0 : i32
    %c0_i32_1 = arith.constant 0 : i32
    return %c0_i32, %c0_i32_0 : i32, i32
  }
  func.func @transform_4(%arg0: i32) -> (i32, i32) {
    %c0_i32 = arith.constant 0 : i32
    %c0_i32_0 = arith.constant 0 : i32
    %c0_i32_1 = arith.constant 0 : i32
    return %c0_i32, %c0_i32_0 : i32, i32
  }
  func.func @transform_5(%arg0: i32) -> (i32, i32) {
    %c0_i32 = arith.constant 0 : i32
    %c0_i32_0 = arith.constant 0 : i32
    %c0_i32_1 = arith.constant 0 : i32
    return %c0_i32, %c0_i32_0 : i32, i32
  }
  func.func @transform_6(%arg0: i32) -> (i32, i32) {
    %c0_i32 = arith.constant 0 : i32
    %c0_i32_0 = arith.constant 0 : i32
    %c0_i32_1 = arith.constant 0 : i32
    return %c0_i32, %c0_i32_0 : i32, i32
  }
  func.func @transform_7(%arg0: i32) -> (i32, i32) {
    %c0_i32 = arith.constant 0 : i32
    %c0_i32_0 = arith.constant 0 : i32
    %c0_i32_1 = arith.constant 0 : i32
    return %c0_i32, %c0_i32_0 : i32, i32
  }
  func.func @transform_8(%arg0: i32) -> (i32, i32) {
    %c0_i32 = arith.constant 0 : i32
    %c0_i32_0 = arith.constant 0 : i32
    %c0_i32_1 = arith.constant 0 : i32
    return %c0_i32, %c0_i32_0 : i32, i32
  }
  func.func @transform_9(%arg0: i32) -> (i32, i32) {
    %c0_i32 = arith.constant 0 : i32
    %c0_i32_0 = arith.constant 0 : i32
    return %c0_i32, %arg0 : i32, i32
  }
}

</mosaic_0001>

<llo_original>
// kernel: hamiltonian_network_quadruped.1
$region0: #{hamiltonian_network_quadruped.1}
  #allocation0 [shape = 'u32[]', space=smem, size = 0x4, offset = 0x4, fixed_abs, tag = 'smem constant byte address 0x4 - core index']
  #allocation1 [shape = 'u32[72,128]{1,0:T(1,128)}', space=vmem, size = 0x9000, scoped, tag = 'internal scratch']
  #allocation2 [shape = 'f32[1,1]{1,0:T(1,128)S(1)}', space=vmem, size = 0x200, scoped, tag = 'scoped memory for hamiltonian_network_quadruped.1']
  %s0 = inlined_call_operand.vmem [shape: f32[16,16], index: 0, kind: input, shape index: {}]
  %s1 = inlined_call_operand.vmem [shape: f32[256,16], index: 1, kind: input, shape index: {}]
  %s2 = inlined_call_operand.vmem [shape: f32[256,1], index: 2, kind: input, shape index: {}]
  %s3 = inlined_call_operand.vmem [shape: f32[256,256], index: 3, kind: input, shape index: {}]
  %s4 = inlined_call_operand.vmem [shape: f32[256,1], index: 4, kind: input, shape index: {}]
  %s5 = inlined_call_operand.vmem [shape: f32[128,256], index: 5, kind: input, shape index: {}]
  %s6 = inlined_call_operand.vmem [shape: f32[128,1], index: 6, kind: input, shape index: {}]
  %s7 = inlined_call_operand.vmem [shape: f32[128,1], index: 7, kind: input, shape index: {}]
  %s8 = inlined_call_operand.<no memory space> [shape: f32[1,1], index: 8, kind: input, shape index: {}]
  %s9 = inlined_call_operand.vmem [shape: f32[1,16], index: 9, kind: output, shape index: {}]
  %s10 = sld [smem:[#allocation0]]
  $region114: #{hamiltonian_network_quadruped.1} parent=0
    _
  %s12 = ssub.s32 1, %s10
  %s13 = scalar_select 0, %s12, %s10
  %v14 = vstv %s8
  %15 = vst [vmem:[#allocation2] sm:$0x1] %v14
  $region1: #{hamiltonian_network_quadruped.1} parent=0
    #allocation3 [shape = 'u8[16384]{0}', space=vmem, size = 0x4000, scoped, tag = 'input window, operand 0, single buffered']
    #allocation4 [shape = 'u8[1024]{0}', space=vmem, size = 0x400, scoped, tag = 'output window, operand 0, single buffered']
    // Predicated region
    $region2: #{hamiltonian_network_quadruped.1} parent=1 // pred_check
      _
    $region3: #{hamiltonian_network_quadruped.1} parent=1 // pred_check_branch
      %17 = sbr.rel (0) target = $region5
    $region4: #{hamiltonian_network_quadruped.1} parent=1 // pred_region
      // Predicated region
      $region6: #{hamiltonian_network_quadruped.1} parent=4 // pred_check
        _
      $region7: #{hamiltonian_network_quadruped.1} parent=4 // pred_check_branch
        %19 = sbr.rel (0) target = $region9
      $region8: #{hamiltonian_network_quadruped.1} parent=4 // pred_region
        // Predicated region
        $region10: #{hamiltonian_network_quadruped.1} parent=8 // pred_check
          _
        $region11: #{hamiltonian_network_quadruped.1} parent=8 // pred_check_branch
          %21 = sbr.rel (0) target = $region13
        $region12: #{hamiltonian_network_quadruped.1} parent=8 // pred_region
          // Predicated region
          $region25: #{hamiltonian_network_quadruped.1} parent=12 // pred_check
            _
          $region26: #{hamiltonian_network_quadruped.1} parent=12 // pred_check_branch
            %39 = sbr.rel (0) target = $region28
          $region27: #{hamiltonian_network_quadruped.1} parent=12 // pred_region
            loop: start=0, step=1, limit=1
            $region29: #{hamiltonian_network_quadruped.1} parent=27 // loop_pre_header
              _
            $region30: #{hamiltonian_network_quadruped.1} parent=27 // loop_header
              %s41 = sphi 0, %s45
              %p42 = scmp.ge.s32.totalorder %s41, 1
              %s46 = sphi %s0, %s0
              %s47 = sphi [#allocation3], [#allocation3]
            $region31: #{hamiltonian_network_quadruped.1} parent=27 // loop_header_branch
              %44 = sbr.rel (%p42) target = $region35
            $region32: #{hamiltonian_network_quadruped.1} parent=27 // loop_body
              %v48 = vld [vmem:[%s46] sm:$0xff]
              %49 = vst [vmem:[%s47] sm:$0xff] %v48
              %v50 = vld [vmem:[%s46 + $0x8] sm:$0xff]
              %51 = vst [vmem:[%s47 + $0x10] sm:$0xff] %v50
            $region33: #{hamiltonian_network_quadruped.1} parent=27 // loop_footer
              %s45 = sadd.s32 1, %s41
            $region34: #{hamiltonian_network_quadruped.1} parent=27 // loop_footer_branch
              %40 = sbr.rel target = $region30
            $region35: #{hamiltonian_network_quadruped.1} parent=27 // loop_exit
              _
          $region28: #{hamiltonian_network_quadruped.1} parent=12 // pred_fallthru
            _
          // Predicated region
          $region36: #{hamiltonian_network_quadruped.1} parent=12 // pred_check
            _
          $region37: #{hamiltonian_network_quadruped.1} parent=12 // pred_check_branch
            %53 = sbr.rel target = $region39
          $region38: #{hamiltonian_network_quadruped.1} parent=12 // pred_region
            _
          $region39: #{hamiltonian_network_quadruped.1} parent=12 // pred_fallthru
            _
        $region13: #{hamiltonian_network_quadruped.1} parent=8 // pred_fallthru
          _
        // Predicated region
        $region14: #{hamiltonian_network_quadruped.1} parent=8 // pred_check
          _
        $region15: #{hamiltonian_network_quadruped.1} parent=8 // pred_check_branch
          %23 = sbr.rel target = $region17
        $region16: #{hamiltonian_network_quadruped.1} parent=8 // pred_region
          %s25 = ssub.s32 256, 1
          loop: start=0, step=1, limit=1
          $region18: #{hamiltonian_network_quadruped.1} parent=16 // loop_pre_header
            _
          $region19: #{hamiltonian_network_quadruped.1} parent=16 // loop_header
            %s27 = sphi 0, %s31
            %p28 = scmp.ge.s32.totalorder %s27, 1
            %s32 = sphi %s0, %s0
            %s33 = sphi [#allocation3], [#allocation3]
          $region20: #{hamiltonian_network_quadruped.1} parent=16 // loop_header_branch
            %30 = sbr.rel (%p28) target = $region24
          $region21: #{hamiltonian_network_quadruped.1} parent=16 // loop_body
            %v34 = vld [vmem:[%s32] sm:%s25]
            %35 = vst [vmem:[%s33] sm:%s25] %v34
            %v36 = vld [vmem:[%s32 + $0x8] sm:%s25]
            %37 = vst [vmem:[%s33 + $0x10] sm:%s25] %v36
          $region22: #{hamiltonian_network_quadruped.1} parent=16 // loop_footer
            %s31 = sadd.s32 1, %s27
          $region23: #{hamiltonian_network_quadruped.1} parent=16 // loop_footer_branch
            %26 = sbr.rel target = $region19
          $region24: #{hamiltonian_network_quadruped.1} parent=16 // loop_exit
            _
        $region17: #{hamiltonian_network_quadruped.1} parent=8 // pred_fallthru
          _
      $region9: #{hamiltonian_network_quadruped.1} parent=4 // pred_fallthru
        _
      %54 = vnop
    $region5: #{hamiltonian_network_quadruped.1} parent=1 // pred_fallthru
      _
    // Predicated region
    $region40: #{hamiltonian_network_quadruped.1} parent=1 // pred_check
      _
    $region41: #{hamiltonian_network_quadruped.1} parent=1 // pred_check_branch
      %56 = sbr.rel (0) target = $region43
    $region42: #{hamiltonian_network_quadruped.1} parent=1 // pred_region
      _
    $region43: #{hamiltonian_network_quadruped.1} parent=1 // pred_fallthru
      _
    // Predicated region
    $region44: #{hamiltonian_network_quadruped.1} parent=1 // pred_check
      _
    $region45: #{hamiltonian_network_quadruped.1} parent=1 // pred_check_branch
      %58 = sbr.rel (0) target = $region47
    $region46: #{hamiltonian_network_quadruped.1} parent=1 // pred_region
      _
    $region47: #{hamiltonian_network_quadruped.1} parent=1 // pred_fallthru
      _
    // Predicated region
    $region48: #{hamiltonian_network_quadruped.1} parent=1 // pred_check
      _
    $region49: #{hamiltonian_network_quadruped.1} parent=1 // pred_check_branch
      %60 = sbr.rel (0) target = $region51
    $region50: #{hamiltonian_network_quadruped.1} parent=1 // pred_region
      _
    $region51: #{hamiltonian_network_quadruped.1} parent=1 // pred_fallthru
      _
    // Predicated region
    $region52: #{hamiltonian_network_quadruped.1} parent=1 // pred_check
      _
    $region53: #{hamiltonian_network_quadruped.1} parent=1 // pred_check_branch
      %62 = sbr.rel (0) target = $region55
    $region54: #{hamiltonian_network_quadruped.1} parent=1 // pred_region
      _
    $region55: #{hamiltonian_network_quadruped.1} parent=1 // pred_fallthru
      _
    // Predicated region
    $region56: #{hamiltonian_network_quadruped.1} parent=1 // pred_check
      _
    $region57: #{hamiltonian_network_quadruped.1} parent=1 // pred_check_branch
      %64 = sbr.rel (0) target = $region59
    $region58: #{hamiltonian_network_quadruped.1} parent=1 // pred_region
      _
    $region59: #{hamiltonian_network_quadruped.1} parent=1 // pred_fallthru
      _
    // Predicated region
    $region60: #{hamiltonian_network_quadruped.1} parent=1 // pred_check
      _
    $region61: #{hamiltonian_network_quadruped.1} parent=1 // pred_check_branch
      %66 = sbr.rel (0) target = $region63
    $region62: #{hamiltonian_network_quadruped.1} parent=1 // pred_region
      _
    $region63: #{hamiltonian_network_quadruped.1} parent=1 // pred_fallthru
      _
    // Predicated region
    $region64: #{hamiltonian_network_quadruped.1} parent=1 // pred_check
      _
    $region65: #{hamiltonian_network_quadruped.1} parent=1 // pred_check_branch
      %68 = sbr.rel (0) target = $region67
    $region66: #{hamiltonian_network_quadruped.1} parent=1 // pred_region
      _
    $region67: #{hamiltonian_network_quadruped.1} parent=1 // pred_fallthru
      _
    // Predicated region
    $region68: #{hamiltonian_network_quadruped.1} parent=1 // pred_check
      _
    $region69: #{hamiltonian_network_quadruped.1} parent=1 // pred_check_branch
      %70 = sbr.rel (0) target = $region71
    $region70: #{hamiltonian_network_quadruped.1} parent=1 // pred_region
      _
    $region71: #{hamiltonian_network_quadruped.1} parent=1 // pred_fallthru
      _
    // Predicated region
    $region72: #{hamiltonian_network_quadruped.1} parent=1 // pred_check
      _
    $region73: #{hamiltonian_network_quadruped.1} parent=1 // pred_check_branch
      %72 = sbr.rel (0) target = $region75
    $region74: #{hamiltonian_network_quadruped.1} parent=1 // pred_region
      _
    $region75: #{hamiltonian_network_quadruped.1} parent=1 // pred_fallthru
      _
    %v73 = vld [vmem:[#allocation3] sm:$0xff]
    %v74 = vld [vmem:[#allocation3 + $0x8] sm:$0xff]
    %v75 = vld [vmem:[#allocation3 + $0x10] sm:$0xff]
    %v76 = vld [vmem:[#allocation3 + $0x18] sm:$0xff]
    %v77 = vld [vmem:[%s1] sm:$0xff]
    %v78 = vld [vmem:[%s1 + $0x8] sm:$0xff]
    %v79 = vld [vmem:[%s1 + $0x10] sm:$0xff]
    %v80 = vld [vmem:[%s1 + $0x18] sm:$0xff]
    %v81 = vld [vmem:[%s1 + $0x20] sm:$0xff]
    %v82 = vld [vmem:[%s1 + $0x28] sm:$0xff]
    %v83 = vld [vmem:[%s1 + $0x30] sm:$0xff]
    %v84 = vld [vmem:[%s1 + $0x38] sm:$0xff]
    %v85 = vld [vmem:[%s1 + $0x40] sm:$0xff]
    %v86 = vld [vmem:[%s1 + $0x48] sm:$0xff]
    %v87 = vld [vmem:[%s1 + $0x50] sm:$0xff]
    %v88 = vld [vmem:[%s1 + $0x58] sm:$0xff]
    %v89 = vld [vmem:[%s1 + $0x60] sm:$0xff]
    %v90 = vld [vmem:[%s1 + $0x68] sm:$0xff]
    %v91 = vld [vmem:[%s1 + $0x70] sm:$0xff]
    %v92 = vld [vmem:[%s1 + $0x78] sm:$0xff]
    %v93 = vld [vmem:[%s1 + $0x80] sm:$0xff]
    %v94 = vld [vmem:[%s1 + $0x88] sm:$0xff]
    %v95 = vld [vmem:[%s1 + $0x90] sm:$0xff]
    %v96 = vld [vmem:[%s1 + $0x98] sm:$0xff]
    %v97 = vld [vmem:[%s1 + $0xa0] sm:$0xff]
    %v98 = vld [vmem:[%s1 + $0xa8] sm:$0xff]
    %v99 = vld [vmem:[%s1 + $0xb0] sm:$0xff]
    %v100 = vld [vmem:[%s1 + $0xb8] sm:$0xff]
    %v101 = vld [vmem:[%s1 + $0xc0] sm:$0xff]
    %v102 = vld [vmem:[%s1 + $0xc8] sm:$0xff]
    %v103 = vld [vmem:[%s1 + $0xd0] sm:$0xff]
    %v104 = vld [vmem:[%s1 + $0xd8] sm:$0xff]
    %v105 = vld [vmem:[%s1 + $0xe0] sm:$0xff]
    %v106 = vld [vmem:[%s1 + $0xe8] sm:$0xff]
    %v107 = vld [vmem:[%s1 + $0xf0] sm:$0xff]
    %v108 = vld [vmem:[%s1 + $0xf8] sm:$0xff]
    %v109 = vld [vmem:[%s2] sm:$0xff]
    %v110 = vld [vmem:[%s2 + $0x8] sm:$0xff]
    %v111 = vld [vmem:[%s2 + $0x10] sm:$0xff]
    %v112 = vld [vmem:[%s2 + $0x18] sm:$0xff]
    %v113 = vld [vmem:[%s2 + $0x20] sm:$0xff]
    %v114 = vld [vmem:[%s2 + $0x28] sm:$0xff]
    %v115 = vld [vmem:[%s2 + $0x30] sm:$0xff]
    %v116 = vld [vmem:[%s2 + $0x38] sm:$0xff]
    %v117 = vld [vmem:[%s2 + $0x40] sm:$0xff]
    %v118 = vld [vmem:[%s2 + $0x48] sm:$0xff]
    %v119 = vld [vmem:[%s2 + $0x50] sm:$0xff]
    %v120 = vld [vmem:[%s2 + $0x58] sm:$0xff]
    %v121 = vld [vmem:[%s2 + $0x60] sm:$0xff]
    %v122 = vld [vmem:[%s2 + $0x68] sm:$0xff]
    %v123 = vld [vmem:[%s2 + $0x70] sm:$0xff]
    %v124 = vld [vmem:[%s2 + $0x78] sm:$0xff]
    %v125 = vld [vmem:[%s2 + $0x80] sm:$0xff]
    %v126 = vld [vmem:[%s2 + $0x88] sm:$0xff]
    %v127 = vld [vmem:[%s2 + $0x90] sm:$0xff]
    %v128 = vld [vmem:[%s2 + $0x98] sm:$0xff]
    %v129 = vld [vmem:[%s2 + $0xa0] sm:$0xff]
    %v130 = vld [vmem:[%s2 + $0xa8] sm:$0xff]
    %v131 = vld [vmem:[%s2 + $0xb0] sm:$0xff]
    %v132 = vld [vmem:[%s2 + $0xb8] sm:$0xff]
    %v133 = vld [vmem:[%s2 + $0xc0] sm:$0xff]
    %v134 = vld [vmem:[%s2 + $0xc8] sm:$0xff]
    %v135 = vld [vmem:[%s2 + $0xd0] sm:$0xff]
    %v136 = vld [vmem:[%s2 + $0xd8] sm:$0xff]
    %v137 = vld [vmem:[%s2 + $0xe0] sm:$0xff]
    %v138 = vld [vmem:[%s2 + $0xe8] sm:$0xff]
    %v139 = vld [vmem:[%s2 + $0xf0] sm:$0xff]
    %v140 = vld [vmem:[%s2 + $0xf8] sm:$0xff]
    %142 = vset.pattern.permute.xlu0 0
    %143 = vperm.xlu0 %142, %v109
    %v144 = vpop.permute.xlu0 %143
    %147 = vset.pattern.permute.xlu0 0
    %148 = vperm.xlu0 %147, %v110
    %v149 = vpop.permute.xlu0 %148
    %152 = vset.pattern.permute.xlu0 0
    %153 = vperm.xlu0 %152, %v111
    %v154 = vpop.permute.xlu0 %153
    %157 = vset.pattern.permute.xlu0 0
    %158 = vperm.xlu0 %157, %v112
    %v159 = vpop.permute.xlu0 %158
    %162 = vset.pattern.permute.xlu0 0
    %163 = vperm.xlu0 %162, %v113
    %v164 = vpop.permute.xlu0 %163
    %167 = vset.pattern.permute.xlu0 0
    %168 = vperm.xlu0 %167, %v114
    %v169 = vpop.permute.xlu0 %168
    %172 = vset.pattern.permute.xlu0 0
    %173 = vperm.xlu0 %172, %v115
    %v174 = vpop.permute.xlu0 %173
    %177 = vset.pattern.permute.xlu0 0
    %178 = vperm.xlu0 %177, %v116
    %v179 = vpop.permute.xlu0 %178
    %182 = vset.pattern.permute.xlu0 0
    %183 = vperm.xlu0 %182, %v117
    %v184 = vpop.permute.xlu0 %183
    %187 = vset.pattern.permute.xlu0 0
    %188 = vperm.xlu0 %187, %v118
    %v189 = vpop.permute.xlu0 %188
    %192 = vset.pattern.permute.xlu0 0
    %193 = vperm.xlu0 %192, %v119
    %v194 = vpop.permute.xlu0 %193
    %197 = vset.pattern.permute.xlu0 0
    %198 = vperm.xlu0 %197, %v120
    %v199 = vpop.permute.xlu0 %198
    %202 = vset.pattern.permute.xlu0 0
    %203 = vperm.xlu0 %202, %v121
    %v204 = vpop.permute.xlu0 %203
    %207 = vset.pattern.permute.xlu0 0
    %208 = vperm.xlu0 %207, %v122
    %v209 = vpop.permute.xlu0 %208
    %212 = vset.pattern.permute.xlu0 0
    %213 = vperm.xlu0 %212, %v123
    %v214 = vpop.permute.xlu0 %213
    %217 = vset.pattern.permute.xlu0 0
    %218 = vperm.xlu0 %217, %v124
    %v219 = vpop.permute.xlu0 %218
    %222 = vset.pattern.permute.xlu0 0
    %223 = vperm.xlu0 %222, %v125
    %v224 = vpop.permute.xlu0 %223
    %227 = vset.pattern.permute.xlu0 0
    %228 = vperm.xlu0 %227, %v126
    %v229 = vpop.permute.xlu0 %228
    %232 = vset.pattern.permute.xlu0 0
    %233 = vperm.xlu0 %232, %v127
    %v234 = vpop.permute.xlu0 %233
    %237 = vset.pattern.permute.xlu0 0
    %238 = vperm.xlu0 %237, %v128
    %v239 = vpop.permute.xlu0 %238
    %242 = vset.pattern.permute.xlu0 0
    %243 = vperm.xlu0 %242, %v129
    %v244 = vpop.permute.xlu0 %243
    %247 = vset.pattern.permute.xlu0 0
    %248 = vperm.xlu0 %247, %v130
    %v249 = vpop.permute.xlu0 %248
    %252 = vset.pattern.permute.xlu0 0
    %253 = vperm.xlu0 %252, %v131
    %v254 = vpop.permute.xlu0 %253
    %257 = vset.pattern.permute.xlu0 0
    %258 = vperm.xlu0 %257, %v132
    %v259 = vpop.permute.xlu0 %258
    %262 = vset.pattern.permute.xlu0 0
    %263 = vperm.xlu0 %262, %v133
    %v264 = vpop.permute.xlu0 %263
    %267 = vset.pattern.permute.xlu0 0
    %268 = vperm.xlu0 %267, %v134
    %v269 = vpop.permute.xlu0 %268
    %272 = vset.pattern.permute.xlu0 0
    %273 = vperm.xlu0 %272, %v135
    %v274 = vpop.permute.xlu0 %273
    %277 = vset.pattern.permute.xlu0 0
    %278 = vperm.xlu0 %277, %v136
    %v279 = vpop.permute.xlu0 %278
    %282 = vset.pattern.permute.xlu0 0
    %283 = vperm.xlu0 %282, %v137
    %v284 = vpop.permute.xlu0 %283
    %287 = vset.pattern.permute.xlu0 0
    %288 = vperm.xlu0 %287, %v138
    %v289 = vpop.permute.xlu0 %288
    %292 = vset.pattern.permute.xlu0 0
    %293 = vperm.xlu0 %292, %v139
    %v294 = vpop.permute.xlu0 %293
    %297 = vset.pattern.permute.xlu0 0
    %298 = vperm.xlu0 %297, %v140
    %v299 = vpop.permute.xlu0 %298
    %vm301 = vcmask 130048
    %v303 = vsel %vm301, %v77, 0
    %v306 = vsel %vm301, %v78, 0
    %v309 = vsel %vm301, %v79, 0
    %v312 = vsel %vm301, %v80, 0
    %v315 = vsel %vm301, %v81, 0
    %v318 = vsel %vm301, %v82, 0
    %v321 = vsel %vm301, %v83, 0
    %v324 = vsel %vm301, %v84, 0
    %v327 = vsel %vm301, %v85, 0
    %v330 = vsel %vm301, %v86, 0
    %v333 = vsel %vm301, %v87, 0
    %v336 = vsel %vm301, %v88, 0
    %v339 = vsel %vm301, %v89, 0
    %v342 = vsel %vm301, %v90, 0
    %v345 = vsel %vm301, %v91, 0
    %v348 = vsel %vm301, %v92, 0
    %v351 = vsel %vm301, %v93, 0
    %v354 = vsel %vm301, %v94, 0
    %v357 = vsel %vm301, %v95, 0
    %v360 = vsel %vm301, %v96, 0
    %v363 = vsel %vm301, %v97, 0
    %v366 = vsel %vm301, %v98, 0
    %v369 = vsel %vm301, %v99, 0
    %v372 = vsel %vm301, %v100, 0
    %v375 = vsel %vm301, %v101, 0
    %v378 = vsel %vm301, %v102, 0
    %v381 = vsel %vm301, %v103, 0
    %v384 = vsel %vm301, %v104, 0
    %v387 = vsel %vm301, %v105, 0
    %v390 = vsel %vm301, %v106, 0
    %v393 = vsel %vm301, %v107, 0
    %v396 = vsel %vm301, %v108, 0
    %398 = vmatpush.msra.mxu0 0.0
    %399 = vmatpush.msra.mxu0 0.0
    %400 = vmatpush.msra.mxu0 0.0
    %401 = vmatpush.msra.mxu0 0.0
    %402 = vmatpush.msra.mxu0 0.0
    %403 = vmatpush.msra.mxu0 0.0
    %404 = vmatpush.msra.mxu0 0.0
    %405 = vmatpush.msra.mxu0 0.0
    %406 = vmatpush.msra.mxu0 0.0
    %407 = vmatpush.msra.mxu0 0.0
    %408 = vmatpush.msra.mxu0 0.0
    %409 = vmatpush.msra.mxu0 0.0
    %410 = vmatpush.msra.mxu0 0.0
    %411 = vmatpush.msra.mxu0 0.0
    %412 = vmatpush.msra.mxu0 %v75
    %413 = vmatpush.msra.mxu0 %v73
    %414 = vmatmul.f32.gmra.mxu0 %v303
    %v415 = vpop.f32.mrf.mxu0
    %v416 = vadd.f32 %v144, %v415
    %417 = vmatmul.f32.gmra.mxu0 %v306
    %v418 = vpop.f32.mrf.mxu0
    %v419 = vadd.f32 %v149, %v418
    %420 = vmatmul.f32.gmra.mxu0 %v309
    %v421 = vpop.f32.mrf.mxu0
    %v422 = vadd.f32 %v154, %v421
    %423 = vmatmul.f32.gmra.mxu0 %v312
    %v424 = vpop.f32.mrf.mxu0
    %v425 = vadd.f32 %v159, %v424
    %426 = vmatmul.f32.gmra.mxu0 %v315
    %v427 = vpop.f32.mrf.mxu0
    %v428 = vadd.f32 %v164, %v427
    %429 = vmatmul.f32.gmra.mxu0 %v318
    %v430 = vpop.f32.mrf.mxu0
    %v431 = vadd.f32 %v169, %v430
    %432 = vmatmul.f32.gmra.mxu0 %v321
    %v433 = vpop.f32.mrf.mxu0
    %v434 = vadd.f32 %v174, %v433
    %435 = vmatmul.f32.gmra.mxu0 %v324
    %v436 = vpop.f32.mrf.mxu0
    %v437 = vadd.f32 %v179, %v436
    %438 = vmatmul.f32.gmra.mxu0 %v327
    %v439 = vpop.f32.mrf.mxu0
    %v440 = vadd.f32 %v184, %v439
    %441 = vmatmul.f32.gmra.mxu0 %v330
    %v442 = vpop.f32.mrf.mxu0
    %v443 = vadd.f32 %v189, %v442
    %444 = vmatmul.f32.gmra.mxu0 %v333
    %v445 = vpop.f32.mrf.mxu0
    %v446 = vadd.f32 %v194, %v445
    %447 = vmatmul.f32.gmra.mxu0 %v336
    %v448 = vpop.f32.mrf.mxu0
    %v449 = vadd.f32 %v199, %v448
    %450 = vmatmul.f32.gmra.mxu0 %v339
    %v451 = vpop.f32.mrf.mxu0
    %v452 = vadd.f32 %v204, %v451
    %453 = vmatmul.f32.gmra.mxu0 %v342
    %v454 = vpop.f32.mrf.mxu0
    %v455 = vadd.f32 %v209, %v454
    %456 = vmatmul.f32.gmra.mxu0 %v345
    %v457 = vpop.f32.mrf.mxu0
    %v458 = vadd.f32 %v214, %v457
    %459 = vmatmul.f32.gmra.mxu0 %v348
    %v460 = vpop.f32.mrf.mxu0
    %v461 = vadd.f32 %v219, %v460
    %462 = vmatmul.f32.gmra.mxu0 %v351
    %v463 = vpop.f32.mrf.mxu0
    %v464 = vadd.f32 %v224, %v463
    %465 = vmatmul.f32.gmra.mxu0 %v354
    %v466 = vpop.f32.mrf.mxu0
    %v467 = vadd.f32 %v229, %v466
    %468 = vmatmul.f32.gmra.mxu0 %v357
    %v469 = vpop.f32.mrf.mxu0
    %v470 = vadd.f32 %v234, %v469
    %471 = vmatmul.f32.gmra.mxu0 %v360
    %v472 = vpop.f32.mrf.mxu0
    %v473 = vadd.f32 %v239, %v472
    %474 = vmatmul.f32.gmra.mxu0 %v363
    %v475 = vpop.f32.mrf.mxu0
    %v476 = vadd.f32 %v244, %v475
    %477 = vmatmul.f32.gmra.mxu0 %v366
    %v478 = vpop.f32.mrf.mxu0
    %v479 = vadd.f32 %v249, %v478
    %480 = vmatmul.f32.gmra.mxu0 %v369
    %v481 = vpop.f32.mrf.mxu0
    %v482 = vadd.f32 %v254, %v481
    %483 = vmatmul.f32.gmra.mxu0 %v372
    %v484 = vpop.f32.mrf.mxu0
    %v485 = vadd.f32 %v259, %v484
    %486 = vmatmul.f32.gmra.mxu0 %v375
    %v487 = vpop.f32.mrf.mxu0
    %v488 = vadd.f32 %v264, %v487
    %489 = vmatmul.f32.gmra.mxu0 %v378
    %v490 = vpop.f32.mrf.mxu0
    %v491 = vadd.f32 %v269, %v490
    %492 = vmatmul.f32.gmra.mxu0 %v381
    %v493 = vpop.f32.mrf.mxu0
    %v494 = vadd.f32 %v274, %v493
    %495 = vmatmul.f32.gmra.mxu0 %v384
    %v496 = vpop.f32.mrf.mxu0
    %v497 = vadd.f32 %v279, %v496
    %498 = vmatmul.f32.gmra.mxu0 %v387
    %v499 = vpop.f32.mrf.mxu0
    %v500 = vadd.f32 %v284, %v499
    %501 = vmatmul.f32.gmra.mxu0 %v390
    %v502 = vpop.f32.mrf.mxu0
    %v503 = vadd.f32 %v289, %v502
    %504 = vmatmul.f32.gmra.mxu0 %v393
    %v505 = vpop.f32.mrf.mxu0
    %v506 = vadd.f32 %v294, %v505
    %507 = vmatmul.f32.gmra.mxu0 %v396
    %v508 = vpop.f32.mrf.mxu0
    %v509 = vadd.f32 %v299, %v508
    %510 = vdwg.mxu0
    %511 = vmatpush.msra.mxu0 0.0
    %512 = vmatpush.msra.mxu0 0.0
    %513 = vmatpush.msra.mxu0 0.0
    %514 = vmatpush.msra.mxu0 0.0
    %515 = vmatpush.msra.mxu0 0.0
    %516 = vmatpush.msra.mxu0 0.0
    %517 = vmatpush.msra.mxu0 0.0
    %518 = vmatpush.msra.mxu0 0.0
    %519 = vmatpush.msra.mxu0 0.0
    %520 = vmatpush.msra.mxu0 0.0
    %521 = vmatpush.msra.mxu0 0.0
    %522 = vmatpush.msra.mxu0 0.0
    %523 = vmatpush.msra.mxu0 0.0
    %524 = vmatpush.msra.mxu0 0.0
    %525 = vmatpush.msra.mxu0 %v76
    %526 = vmatpush.msra.mxu0 %v74
    %527 = vmatmul.f32.gmra.mxu0 %v303
    %v528 = vpop.f32.mrf.mxu0
    %v529 = vadd.f32 %v144, %v528
    %530 = vmatmul.f32.gmra.mxu0 %v306
    %v531 = vpop.f32.mrf.mxu0
    %v532 = vadd.f32 %v149, %v531
    %533 = vmatmul.f32.gmra.mxu0 %v309
    %v534 = vpop.f32.mrf.mxu0
    %v535 = vadd.f32 %v154, %v534
    %536 = vmatmul.f32.gmra.mxu0 %v312
    %v537 = vpop.f32.mrf.mxu0
    %v538 = vadd.f32 %v159, %v537
    %539 = vmatmul.f32.gmra.mxu0 %v315
    %v540 = vpop.f32.mrf.mxu0
    %v541 = vadd.f32 %v164, %v540
    %542 = vmatmul.f32.gmra.mxu0 %v318
    %v543 = vpop.f32.mrf.mxu0
    %v544 = vadd.f32 %v169, %v543
    %545 = vmatmul.f32.gmra.mxu0 %v321
    %v546 = vpop.f32.mrf.mxu0
    %v547 = vadd.f32 %v174, %v546
    %548 = vmatmul.f32.gmra.mxu0 %v324
    %v549 = vpop.f32.mrf.mxu0
    %v550 = vadd.f32 %v179, %v549
    %551 = vmatmul.f32.gmra.mxu0 %v327
    %v552 = vpop.f32.mrf.mxu0
    %v553 = vadd.f32 %v184, %v552
    %554 = vmatmul.f32.gmra.mxu0 %v330
    %v555 = vpop.f32.mrf.mxu0
    %v556 = vadd.f32 %v189, %v555
    %557 = vmatmul.f32.gmra.mxu0 %v333
    %v558 = vpop.f32.mrf.mxu0
    %v559 = vadd.f32 %v194, %v558
    %560 = vmatmul.f32.gmra.mxu0 %v336
    %v561 = vpop.f32.mrf.mxu0
    %v562 = vadd.f32 %v199, %v561
    %563 = vmatmul.f32.gmra.mxu0 %v339
    %v564 = vpop.f32.mrf.mxu0
    %v565 = vadd.f32 %v204, %v564
    %566 = vmatmul.f32.gmra.mxu0 %v342
    %v567 = vpop.f32.mrf.mxu0
    %v568 = vadd.f32 %v209, %v567
    %569 = vmatmul.f32.gmra.mxu0 %v345
    %v570 = vpop.f32.mrf.mxu0
    %v571 = vadd.f32 %v214, %v570
    %572 = vmatmul.f32.gmra.mxu0 %v348
    %v573 = vpop.f32.mrf.mxu0
    %v574 = vadd.f32 %v219, %v573
    %575 = vmatmul.f32.gmra.mxu0 %v351
    %v576 = vpop.f32.mrf.mxu0
    %v577 = vadd.f32 %v224, %v576
    %578 = vmatmul.f32.gmra.mxu0 %v354
    %v579 = vpop.f32.mrf.mxu0
    %v580 = vadd.f32 %v229, %v579
    %581 = vmatmul.f32.gmra.mxu0 %v357
    %v582 = vpop.f32.mrf.mxu0
    %v583 = vadd.f32 %v234, %v582
    %584 = vmatmul.f32.gmra.mxu0 %v360
    %v585 = vpop.f32.mrf.mxu0
    %v586 = vadd.f32 %v239, %v585
    %587 = vmatmul.f32.gmra.mxu0 %v363
    %v588 = vpop.f32.mrf.mxu0
    %v589 = vadd.f32 %v244, %v588
    %590 = vmatmul.f32.gmra.mxu0 %v366
    %v591 = vpop.f32.mrf.mxu0
    %v592 = vadd.f32 %v249, %v591
    %593 = vmatmul.f32.gmra.mxu0 %v369
    %v594 = vpop.f32.mrf.mxu0
    %v595 = vadd.f32 %v254, %v594
    %596 = vmatmul.f32.gmra.mxu0 %v372
    %v597 = vpop.f32.mrf.mxu0
    %v598 = vadd.f32 %v259, %v597
    %599 = vmatmul.f32.gmra.mxu0 %v375
    %v600 = vpop.f32.mrf.mxu0
    %v601 = vadd.f32 %v264, %v600
    %602 = vmatmul.f32.gmra.mxu0 %v378
    %v603 = vpop.f32.mrf.mxu0
    %v604 = vadd.f32 %v269, %v603
    %605 = vmatmul.f32.gmra.mxu0 %v381
    %v606 = vpop.f32.mrf.mxu0
    %v607 = vadd.f32 %v274, %v606
    %608 = vmatmul.f32.gmra.mxu0 %v384
    %v609 = vpop.f32.mrf.mxu0
    %v610 = vadd.f32 %v279, %v609
    %611 = vmatmul.f32.gmra.mxu0 %v387
    %v612 = vpop.f32.mrf.mxu0
    %v613 = vadd.f32 %v284, %v612
    %614 = vmatmul.f32.gmra.mxu0 %v390
    %v615 = vpop.f32.mrf.mxu0
    %v616 = vadd.f32 %v289, %v615
    %617 = vmatmul.f32.gmra.mxu0 %v393
    %v618 = vpop.f32.mrf.mxu0
    %v619 = vadd.f32 %v294, %v618
    %620 = vmatmul.f32.gmra.mxu0 %v396
    %v621 = vpop.f32.mrf.mxu0
    %v622 = vadd.f32 %v299, %v621
    %623 = vdwg.mxu0
    %v624 = vmax.f32 %v416, 0.0
    %v625 = vmax.f32 %v529, 0.0
    %v626 = vmax.f32 %v419, 0.0
    %v627 = vmax.f32 %v532, 0.0
    %v628 = vmax.f32 %v422, 0.0
    %v629 = vmax.f32 %v535, 0.0
    %v630 = vmax.f32 %v425, 0.0
    %v631 = vmax.f32 %v538, 0.0
    %v632 = vmax.f32 %v428, 0.0
    %v633 = vmax.f32 %v541, 0.0
    %v634 = vmax.f32 %v431, 0.0
    %v635 = vmax.f32 %v544, 0.0
    %v636 = vmax.f32 %v434, 0.0
    %v637 = vmax.f32 %v547, 0.0
    %v638 = vmax.f32 %v437, 0.0
    %v639 = vmax.f32 %v550, 0.0
    %v640 = vmax.f32 %v440, 0.0
    %v641 = vmax.f32 %v553, 0.0
    %v642 = vmax.f32 %v443, 0.0
    %v643 = vmax.f32 %v556, 0.0
    %v644 = vmax.f32 %v446, 0.0
    %v645 = vmax.f32 %v559, 0.0
    %v646 = vmax.f32 %v449, 0.0
    %v647 = vmax.f32 %v562, 0.0
    %v648 = vmax.f32 %v452, 0.0
    %v649 = vmax.f32 %v565, 0.0
    %v650 = vmax.f32 %v455, 0.0
    %v651 = vmax.f32 %v568, 0.0
    %v652 = vmax.f32 %v458, 0.0
    %v653 = vmax.f32 %v571, 0.0
    %v654 = vmax.f32 %v461, 0.0
    %v655 = vmax.f32 %v574, 0.0
    %v656 = vmax.f32 %v464, 0.0
    %v657 = vmax.f32 %v577, 0.0
    %v658 = vmax.f32 %v467, 0.0
    %v659 = vmax.f32 %v580, 0.0
    %v660 = vmax.f32 %v470, 0.0
    %v661 = vmax.f32 %v583, 0.0
    %v662 = vmax.f32 %v473, 0.0
    %v663 = vmax.f32 %v586, 0.0
    %v664 = vmax.f32 %v476, 0.0
    %v665 = vmax.f32 %v589, 0.0
    %v666 = vmax.f32 %v479, 0.0
    %v667 = vmax.f32 %v592, 0.0
    %v668 = vmax.f32 %v482, 0.0
    %v669 = vmax.f32 %v595, 0.0
    %v670 = vmax.f32 %v485, 0.0
    %v671 = vmax.f32 %v598, 0.0
    %v672 = vmax.f32 %v488, 0.0
    %v673 = vmax.f32 %v601, 0.0
    %v674 = vmax.f32 %v491, 0.0
    %v675 = vmax.f32 %v604, 0.0
    %v676 = vmax.f32 %v494, 0.0
    %v677 = vmax.f32 %v607, 0.0
    %v678 = vmax.f32 %v497, 0.0
    %v679 = vmax.f32 %v610, 0.0
    %v680 = vmax.f32 %v500, 0.0
    %v681 = vmax.f32 %v613, 0.0
    %v682 = vmax.f32 %v503, 0.0
    %v683 = vmax.f32 %v616, 0.0
    %v684 = vmax.f32 %v506, 0.0
    %v685 = vmax.f32 %v619, 0.0
    %v686 = vmax.f32 %v509, 0.0
    %v687 = vmax.f32 %v622, 0.0
    %v688 = vld [vmem:[%s3] sm:$0xff]
    %v689 = vld [vmem:[%s3 + $0x8] sm:$0xff]
    %v690 = vld [vmem:[%s3 + $0x10] sm:$0xff]
    %v691 = vld [vmem:[%s3 + $0x18] sm:$0xff]
    %v692 = vld [vmem:[%s3 + $0x20] sm:$0xff]
    %v693 = vld [vmem:[%s3 + $0x28] sm:$0xff]
    %v694 = vld [vmem:[%s3 + $0x30] sm:$0xff]
    %v695 = vld [vmem:[%s3 + $0x38] sm:$0xff]
    %v696 = vld [vmem:[%s3 + $0x40] sm:$0xff]
    %v697 = vld [vmem:[%s3 + $0x48] sm:$0xff]
    %v698 = vld [vmem:[%s3 + $0x50] sm:$0xff]
    %v699 = vld [vmem:[%s3 + $0x58] sm:$0xff]
    %v700 = vld [vmem:[%s3 + $0x60] sm:$0xff]
    %v701 = vld [vmem:[%s3 + $0x68] sm:$0xff]
    %v702 = vld [vmem:[%s3 + $0x70] sm:$0xff]
    %v703 = vld [vmem:[%s3 + $0x78] sm:$0xff]
    %v704 = vld [vmem:[%s3 + $0x80] sm:$0xff]
    %v705 = vld [vmem:[%s3 + $0x88] sm:$0xff]
    %v706 = vld [vmem:[%s3 + $0x90] sm:$0xff]
    %v707 = vld [vmem:[%s3 + $0x98] sm:$0xff]
    %v708 = vld [vmem:[%s3 + $0xa0] sm:$0xff]
    %v709 = vld [vmem:[%s3 + $0xa8] sm:$0xff]
    %v710 = vld [vmem:[%s3 + $0xb0] sm:$0xff]
    %v711 = vld [vmem:[%s3 + $0xb8] sm:$0xff]
    %v712 = vld [vmem:[%s3 + $0xc0] sm:$0xff]
    %v713 = vld [vmem:[%s3 + $0xc8] sm:$0xff]
    %v714 = vld [vmem:[%s3 + $0xd0] sm:$0xff]
    %v715 = vld [vmem:[%s3 + $0xd8] sm:$0xff]
    %v716 = vld [vmem:[%s3 + $0xe0] sm:$0xff]
    %v717 = vld [vmem:[%s3 + $0xe8] sm:$0xff]
    %v718 = vld [vmem:[%s3 + $0xf0] sm:$0xff]
    %v719 = vld [vmem:[%s3 + $0xf8] sm:$0xff]
    %v720 = vld [vmem:[%s3 + $0x100] sm:$0xff]
    %v721 = vld [vmem:[%s3 + $0x108] sm:$0xff]
    %v722 = vld [vmem:[%s3 + $0x110] sm:$0xff]
    %v723 = vld [vmem:[%s3 + $0x118] sm:$0xff]
    %v724 = vld [vmem:[%s3 + $0x120] sm:$0xff]
    %v725 = vld [vmem:[%s3 + $0x128] sm:$0xff]
    %v726 = vld [vmem:[%s3 + $0x130] sm:$0xff]
    %v727 = vld [vmem:[%s3 + $0x138] sm:$0xff]
    %v728 = vld [vmem:[%s3 + $0x140] sm:$0xff]
    %v729 = vld [vmem:[%s3 + $0x148] sm:$0xff]
    %v730 = vld [vmem:[%s3 + $0x150] sm:$0xff]
    %v731 = vld [vmem:[%s3 + $0x158] sm:$0xff]
    %v732 = vld [vmem:[%s3 + $0x160] sm:$0xff]
    %v733 = vld [vmem:[%s3 + $0x168] sm:$0xff]
    %v734 = vld [vmem:[%s3 + $0x170] sm:$0xff]
    %v735 = vld [vmem:[%s3 + $0x178] sm:$0xff]
    %v736 = vld [vmem:[%s3 + $0x180] sm:$0xff]
    %v737 = vld [vmem:[%s3 + $0x188] sm:$0xff]
    %v738 = vld [vmem:[%s3 + $0x190] sm:$0xff]
    %v739 = vld [vmem:[%s3 + $0x198] sm:$0xff]
    %v740 = vld [vmem:[%s3 + $0x1a0] sm:$0xff]
    %v741 = vld [vmem:[%s3 + $0x1a8] sm:$0xff]
    %v742 = vld [vmem:[%s3 + $0x1b0] sm:$0xff]
    %v743 = vld [vmem:[%s3 + $0x1b8] sm:$0xff]
    %v744 = vld [vmem:[%s3 + $0x1c0] sm:$0xff]
    %v745 = vld [vmem:[%s3 + $0x1c8] sm:$0xff]
    %v746 = vld [vmem:[%s3 + $0x1d0] sm:$0xff]
    %v747 = vld [vmem:[%s3 + $0x1d8] sm:$0xff]
    %v748 = vld [vmem:[%s3 + $0x1e0] sm:$0xff]
    %v749 = vld [vmem:[%s3 + $0x1e8] sm:$0xff]
    %v750 = vld [vmem:[%s3 + $0x1f0] sm:$0xff]
    %v751 = vld [vmem:[%s3 + $0x1f8] sm:$0xff]
    %v752 = vld [vmem:[%s4] sm:$0xff]
    %v753 = vld [vmem:[%s4 + $0x8] sm:$0xff]
    %v754 = vld [vmem:[%s4 + $0x10] sm:$0xff]
    %v755 = vld [vmem:[%s4 + $0x18] sm:$0xff]
    %v756 = vld [vmem:[%s4 + $0x20] sm:$0xff]
    %v757 = vld [vmem:[%s4 + $0x28] sm:$0xff]
    %v758 = vld [vmem:[%s4 + $0x30] sm:$0xff]
    %v759 = vld [vmem:[%s4 + $0x38] sm:$0xff]
    %v760 = vld [vmem:[%s4 + $0x40] sm:$0xff]
    %v761 = vld [vmem:[%s4 + $0x48] sm:$0xff]
    %v762 = vld [vmem:[%s4 + $0x50] sm:$0xff]
    %v763 = vld [vmem:[%s4 + $0x58] sm:$0xff]
    %v764 = vld [vmem:[%s4 + $0x60] sm:$0xff]
    %v765 = vld [vmem:[%s4 + $0x68] sm:$0xff]
    %v766 = vld [vmem:[%s4 + $0x70] sm:$0xff]
    %v767 = vld [vmem:[%s4 + $0x78] sm:$0xff]
    %v768 = vld [vmem:[%s4 + $0x80] sm:$0xff]
    %v769 = vld [vmem:[%s4 + $0x88] sm:$0xff]
    %v770 = vld [vmem:[%s4 + $0x90] sm:$0xff]
    %v771 = vld [vmem:[%s4 + $0x98] sm:$0xff]
    %v772 = vld [vmem:[%s4 + $0xa0] sm:$0xff]
    %v773 = vld [vmem:[%s4 + $0xa8] sm:$0xff]
    %v774 = vld [vmem:[%s4 + $0xb0] sm:$0xff]
    %v775 = vld [vmem:[%s4 + $0xb8] sm:$0xff]
    %v776 = vld [vmem:[%s4 + $0xc0] sm:$0xff]
    %v777 = vld [vmem:[%s4 + $0xc8] sm:$0xff]
    %v778 = vld [vmem:[%s4 + $0xd0] sm:$0xff]
    %v779 = vld [vmem:[%s4 + $0xd8] sm:$0xff]
    %v780 = vld [vmem:[%s4 + $0xe0] sm:$0xff]
    %v781 = vld [vmem:[%s4 + $0xe8] sm:$0xff]
    %v782 = vld [vmem:[%s4 + $0xf0] sm:$0xff]
    %v783 = vld [vmem:[%s4 + $0xf8] sm:$0xff]
    %785 = vset.pattern.permute.xlu0 0
    %786 = vperm.xlu0 %785, %v752
    %v787 = vpop.permute.xlu0 %786
    %790 = vset.pattern.permute.xlu0 0
    %791 = vperm.xlu0 %790, %v753
    %v792 = vpop.permute.xlu0 %791
    %795 = vset.pattern.permute.xlu0 0
    %796 = vperm.xlu0 %795, %v754
    %v797 = vpop.permute.xlu0 %796
    %800 = vset.pattern.permute.xlu0 0
    %801 = vperm.xlu0 %800, %v755
    %v802 = vpop.permute.xlu0 %801
    %805 = vset.pattern.permute.xlu0 0
    %806 = vperm.xlu0 %805, %v756
    %v807 = vpop.permute.xlu0 %806
    %810 = vset.pattern.permute.xlu0 0
    %811 = vperm.xlu0 %810, %v757
    %v812 = vpop.permute.xlu0 %811
    %815 = vset.pattern.permute.xlu0 0
    %816 = vperm.xlu0 %815, %v758
    %v817 = vpop.permute.xlu0 %816
    %820 = vset.pattern.permute.xlu0 0
    %821 = vperm.xlu0 %820, %v759
    %v822 = vpop.permute.xlu0 %821
    %825 = vset.pattern.permute.xlu0 0
    %826 = vperm.xlu0 %825, %v760
    %v827 = vpop.permute.xlu0 %826
    %830 = vset.pattern.permute.xlu0 0
    %831 = vperm.xlu0 %830, %v761
    %v832 = vpop.permute.xlu0 %831
    %835 = vset.pattern.permute.xlu0 0
    %836 = vperm.xlu0 %835, %v762
    %v837 = vpop.permute.xlu0 %836
    %840 = vset.pattern.permute.xlu0 0
    %841 = vperm.xlu0 %840, %v763
    %v842 = vpop.permute.xlu0 %841
    %845 = vset.pattern.permute.xlu0 0
    %846 = vperm.xlu0 %845, %v764
    %v847 = vpop.permute.xlu0 %846
    %850 = vset.pattern.permute.xlu0 0
    %851 = vperm.xlu0 %850, %v765
    %v852 = vpop.permute.xlu0 %851
    %855 = vset.pattern.permute.xlu0 0
    %856 = vperm.xlu0 %855, %v766
    %v857 = vpop.permute.xlu0 %856
    %860 = vset.pattern.permute.xlu0 0
    %861 = vperm.xlu0 %860, %v767
    %v862 = vpop.permute.xlu0 %861
    %865 = vset.pattern.permute.xlu0 0
    %866 = vperm.xlu0 %865, %v768
    %v867 = vpop.permute.xlu0 %866
    %870 = vset.pattern.permute.xlu0 0
    %871 = vperm.xlu0 %870, %v769
    %v872 = vpop.permute.xlu0 %871
    %875 = vset.pattern.permute.xlu0 0
    %876 = vperm.xlu0 %875, %v770
    %v877 = vpop.permute.xlu0 %876
    %880 = vset.pattern.permute.xlu0 0
    %881 = vperm.xlu0 %880, %v771
    %v882 = vpop.permute.xlu0 %881
    %885 = vset.pattern.permute.xlu0 0
    %886 = vperm.xlu0 %885, %v772
    %v887 = vpop.permute.xlu0 %886
    %890 = vset.pattern.permute.xlu0 0
    %891 = vperm.xlu0 %890, %v773
    %v892 = vpop.permute.xlu0 %891
    %895 = vset.pattern.permute.xlu0 0
    %896 = vperm.xlu0 %895, %v774
    %v897 = vpop.permute.xlu0 %896
    %900 = vset.pattern.permute.xlu0 0
    %901 = vperm.xlu0 %900, %v775
    %v902 = vpop.permute.xlu0 %901
    %905 = vset.pattern.permute.xlu0 0
    %906 = vperm.xlu0 %905, %v776
    %v907 = vpop.permute.xlu0 %906
    %910 = vset.pattern.permute.xlu0 0
    %911 = vperm.xlu0 %910, %v777
    %v912 = vpop.permute.xlu0 %911
    %915 = vset.pattern.permute.xlu0 0
    %916 = vperm.xlu0 %915, %v778
    %v917 = vpop.permute.xlu0 %916
    %920 = vset.pattern.permute.xlu0 0
    %921 = vperm.xlu0 %920, %v779
    %v922 = vpop.permute.xlu0 %921
    %925 = vset.pattern.permute.xlu0 0
    %926 = vperm.xlu0 %925, %v780
    %v927 = vpop.permute.xlu0 %926
    %930 = vset.pattern.permute.xlu0 0
    %931 = vperm.xlu0 %930, %v781
    %v932 = vpop.permute.xlu0 %931
    %935 = vset.pattern.permute.xlu0 0
    %936 = vperm.xlu0 %935, %v782
    %v937 = vpop.permute.xlu0 %936
    %940 = vset.pattern.permute.xlu0 0
    %941 = vperm.xlu0 %940, %v783
    %v942 = vpop.permute.xlu0 %941
    %944 = vmatpush.msra.mxu0 %v654
    %945 = vmatpush.msra.mxu0 %v652
    %946 = vmatpush.msra.mxu0 %v650
    %947 = vmatpush.msra.mxu0 %v648
    %948 = vmatpush.msra.mxu0 %v646
    %949 = vmatpush.msra.mxu0 %v644
    %950 = vmatpush.msra.mxu0 %v642
    %951 = vmatpush.msra.mxu0 %v640
    %952 = vmatpush.msra.mxu0 %v638
    %953 = vmatpush.msra.mxu0 %v636
    %954 = vmatpush.msra.mxu0 %v634
    %955 = vmatpush.msra.mxu0 %v632
    %956 = vmatpush.msra.mxu0 %v630
    %957 = vmatpush.msra.mxu0 %v628
    %958 = vmatpush.msra.mxu0 %v626
    %959 = vmatpush.msra.mxu0 %v624
    %960 = vmatmul.f32.gmra.mxu0 %v688
    %v961 = vpop.f32.mrf.mxu0
    %v962 = vadd.f32 %v787, %v961
    %963 = vmatmul.f32.gmra.mxu0 %v690
    %v964 = vpop.f32.mrf.mxu0
    %v965 = vadd.f32 %v792, %v964
    %966 = vmatmul.f32.gmra.mxu0 %v692
    %v967 = vpop.f32.mrf.mxu0
    %v968 = vadd.f32 %v797, %v967
    %969 = vmatmul.f32.gmra.mxu0 %v694
    %v970 = vpop.f32.mrf.mxu0
    %v971 = vadd.f32 %v802, %v970
    %972 = vmatmul.f32.gmra.mxu0 %v696
    %v973 = vpop.f32.mrf.mxu0
    %v974 = vadd.f32 %v807, %v973
    %975 = vmatmul.f32.gmra.mxu0 %v698
    %v976 = vpop.f32.mrf.mxu0
    %v977 = vadd.f32 %v812, %v976
    %978 = vmatmul.f32.gmra.mxu0 %v700
    %v979 = vpop.f32.mrf.mxu0
    %v980 = vadd.f32 %v817, %v979
    %981 = vmatmul.f32.gmra.mxu0 %v702
    %v982 = vpop.f32.mrf.mxu0
    %v983 = vadd.f32 %v822, %v982
    %984 = vmatmul.f32.gmra.mxu0 %v704
    %v985 = vpop.f32.mrf.mxu0
    %v986 = vadd.f32 %v827, %v985
    %987 = vmatmul.f32.gmra.mxu0 %v706
    %v988 = vpop.f32.mrf.mxu0
    %v989 = vadd.f32 %v832, %v988
    %990 = vmatmul.f32.gmra.mxu0 %v708
    %v991 = vpop.f32.mrf.mxu0
    %v992 = vadd.f32 %v837, %v991
    %993 = vmatmul.f32.gmra.mxu0 %v710
    %v994 = vpop.f32.mrf.mxu0
    %v995 = vadd.f32 %v842, %v994
    %996 = vmatmul.f32.gmra.mxu0 %v712
    %v997 = vpop.f32.mrf.mxu0
    %v998 = vadd.f32 %v847, %v997
    %999 = vmatmul.f32.gmra.mxu0 %v714
    %v1000 = vpop.f32.mrf.mxu0
    %v1001 = vadd.f32 %v852, %v1000
    %1002 = vmatmul.f32.gmra.mxu0 %v716
    %v1003 = vpop.f32.mrf.mxu0
    %v1004 = vadd.f32 %v857, %v1003
    %1005 = vmatmul.f32.gmra.mxu0 %v718
    %v1006 = vpop.f32.mrf.mxu0
    %v1007 = vadd.f32 %v862, %v1006
    %1008 = vmatmul.f32.gmra.mxu0 %v720
    %v1009 = vpop.f32.mrf.mxu0
    %v1010 = vadd.f32 %v867, %v1009
    %1011 = vmatmul.f32.gmra.mxu0 %v722
    %v1012 = vpop.f32.mrf.mxu0
    %v1013 = vadd.f32 %v872, %v1012
    %1014 = vmatmul.f32.gmra.mxu0 %v724
    %v1015 = vpop.f32.mrf.mxu0
    %v1016 = vadd.f32 %v877, %v1015
    %1017 = vmatmul.f32.gmra.mxu0 %v726
    %v1018 = vpop.f32.mrf.mxu0
    %v1019 = vadd.f32 %v882, %v1018
    %1020 = vmatmul.f32.gmra.mxu0 %v728
    %v1021 = vpop.f32.mrf.mxu0
    %v1022 = vadd.f32 %v887, %v1021
    %1023 = vmatmul.f32.gmra.mxu0 %v730
    %v1024 = vpop.f32.mrf.mxu0
    %v1025 = vadd.f32 %v892, %v1024
    %1026 = vmatmul.f32.gmra.mxu0 %v732
    %v1027 = vpop.f32.mrf.mxu0
    %v1028 = vadd.f32 %v897, %v1027
    %1029 = vmatmul.f32.gmra.mxu0 %v734
    %v1030 = vpop.f32.mrf.mxu0
    %v1031 = vadd.f32 %v902, %v1030
    %1032 = vmatmul.f32.gmra.mxu0 %v736
    %v1033 = vpop.f32.mrf.mxu0
    %v1034 = vadd.f32 %v907, %v1033
    %1035 = vmatmul.f32.gmra.mxu0 %v738
    %v1036 = vpop.f32.mrf.mxu0
    %v1037 = vadd.f32 %v912, %v1036
    %1038 = vmatmul.f32.gmra.mxu0 %v740
    %v1039 = vpop.f32.mrf.mxu0
    %v1040 = vadd.f32 %v917, %v1039
    %1041 = vmatmul.f32.gmra.mxu0 %v742
    %v1042 = vpop.f32.mrf.mxu0
    %v1043 = vadd.f32 %v922, %v1042
    %1044 = vmatmul.f32.gmra.mxu0 %v744
    %v1045 = vpop.f32.mrf.mxu0
    %v1046 = vadd.f32 %v927, %v1045
    %1047 = vmatmul.f32.gmra.mxu0 %v746
    %v1048 = vpop.f32.mrf.mxu0
    %v1049 = vadd.f32 %v932, %v1048
    %1050 = vmatmul.f32.gmra.mxu0 %v748
    %v1051 = vpop.f32.mrf.mxu0
    %v1052 = vadd.f32 %v937, %v1051
    %1053 = vmatmul.f32.gmra.mxu0 %v750
    %v1054 = vpop.f32.mrf.mxu0
    %v1055 = vadd.f32 %v942, %v1054
    %1056 = vdwg.mxu0
    %1057 = vmatpush.msra.mxu0 %v686
    %1058 = vmatpush.msra.mxu0 %v684
    %1059 = vmatpush.msra.mxu0 %v682
    %1060 = vmatpush.msra.mxu0 %v680
    %1061 = vmatpush.msra.mxu0 %v678
    %1062 = vmatpush.msra.mxu0 %v676
    %1063 = vmatpush.msra.mxu0 %v674
    %1064 = vmatpush.msra.mxu0 %v672
    %1065 = vmatpush.msra.mxu0 %v670
    %1066 = vmatpush.msra.mxu0 %v668
    %1067 = vmatpush.msra.mxu0 %v666
    %1068 = vmatpush.msra.mxu0 %v664
    %1069 = vmatpush.msra.mxu0 %v662
    %1070 = vmatpush.msra.mxu0 %v660
    %1071 = vmatpush.msra.mxu0 %v658
    %1072 = vmatpush.msra.mxu0 %v656
    %1073 = vmatmul.f32.gmra.mxu0 %v689
    %v1074 = vpop.f32.mrf.mxu0
    %v1075 = vadd.f32 %v962, %v1074
    %1076 = vmatmul.f32.gmra.mxu0 %v691
    %v1077 = vpop.f32.mrf.mxu0
    %v1078 = vadd.f32 %v965, %v1077
    %1079 = vmatmul.f32.gmra.mxu0 %v693
    %v1080 = vpop.f32.mrf.mxu0
    %v1081 = vadd.f32 %v968, %v1080
    %1082 = vmatmul.f32.gmra.mxu0 %v695
    %v1083 = vpop.f32.mrf.mxu0
    %v1084 = vadd.f32 %v971, %v1083
    %1085 = vmatmul.f32.gmra.mxu0 %v697
    %v1086 = vpop.f32.mrf.mxu0
    %v1087 = vadd.f32 %v974, %v1086
    %1088 = vmatmul.f32.gmra.mxu0 %v699
    %v1089 = vpop.f32.mrf.mxu0
    %v1090 = vadd.f32 %v977, %v1089
    %1091 = vmatmul.f32.gmra.mxu0 %v701
    %v1092 = vpop.f32.mrf.mxu0
    %v1093 = vadd.f32 %v980, %v1092
    %1094 = vmatmul.f32.gmra.mxu0 %v703
    %v1095 = vpop.f32.mrf.mxu0
    %v1096 = vadd.f32 %v983, %v1095
    %1097 = vmatmul.f32.gmra.mxu0 %v705
    %v1098 = vpop.f32.mrf.mxu0
    %v1099 = vadd.f32 %v986, %v1098
    %1100 = vmatmul.f32.gmra.mxu0 %v707
    %v1101 = vpop.f32.mrf.mxu0
    %v1102 = vadd.f32 %v989, %v1101
    %1103 = vmatmul.f32.gmra.mxu0 %v709
    %v1104 = vpop.f32.mrf.mxu0
    %v1105 = vadd.f32 %v992, %v1104
    %1106 = vmatmul.f32.gmra.mxu0 %v711
    %v1107 = vpop.f32.mrf.mxu0
    %v1108 = vadd.f32 %v995, %v1107
    %1109 = vmatmul.f32.gmra.mxu0 %v713
    %v1110 = vpop.f32.mrf.mxu0
    %v1111 = vadd.f32 %v998, %v1110
    %1112 = vmatmul.f32.gmra.mxu0 %v715
    %v1113 = vpop.f32.mrf.mxu0
    %v1114 = vadd.f32 %v1001, %v1113
    %1115 = vmatmul.f32.gmra.mxu0 %v717
    %v1116 = vpop.f32.mrf.mxu0
    %v1117 = vadd.f32 %v1004, %v1116
    %1118 = vmatmul.f32.gmra.mxu0 %v719
    %v1119 = vpop.f32.mrf.mxu0
    %v1120 = vadd.f32 %v1007, %v1119
    %1121 = vmatmul.f32.gmra.mxu0 %v721
    %v1122 = vpop.f32.mrf.mxu0
    %v1123 = vadd.f32 %v1010, %v1122
    %1124 = vmatmul.f32.gmra.mxu0 %v723
    %v1125 = vpop.f32.mrf.mxu0
    %v1126 = vadd.f32 %v1013, %v1125
    %1127 = vmatmul.f32.gmra.mxu0 %v725
    %v1128 = vpop.f32.mrf.mxu0
    %v1129 = vadd.f32 %v1016, %v1128
    %1130 = vmatmul.f32.gmra.mxu0 %v727
    %v1131 = vpop.f32.mrf.mxu0
    %v1132 = vadd.f32 %v1019, %v1131
    %1133 = vmatmul.f32.gmra.mxu0 %v729
    %v1134 = vpop.f32.mrf.mxu0
    %v1135 = vadd.f32 %v1022, %v1134
    %1136 = vmatmul.f32.gmra.mxu0 %v731
    %v1137 = vpop.f32.mrf.mxu0
    %v1138 = vadd.f32 %v1025, %v1137
    %1139 = vmatmul.f32.gmra.mxu0 %v733
    %v1140 = vpop.f32.mrf.mxu0
    %v1141 = vadd.f32 %v1028, %v1140
    %1142 = vmatmul.f32.gmra.mxu0 %v735
    %v1143 = vpop.f32.mrf.mxu0
    %v1144 = vadd.f32 %v1031, %v1143
    %1145 = vmatmul.f32.gmra.mxu0 %v737
    %v1146 = vpop.f32.mrf.mxu0
    %v1147 = vadd.f32 %v1034, %v1146
    %1148 = vmatmul.f32.gmra.mxu0 %v739
    %v1149 = vpop.f32.mrf.mxu0
    %v1150 = vadd.f32 %v1037, %v1149
    %1151 = vmatmul.f32.gmra.mxu0 %v741
    %v1152 = vpop.f32.mrf.mxu0
    %v1153 = vadd.f32 %v1040, %v1152
    %1154 = vmatmul.f32.gmra.mxu0 %v743
    %v1155 = vpop.f32.mrf.mxu0
    %v1156 = vadd.f32 %v1043, %v1155
    %1157 = vmatmul.f32.gmra.mxu0 %v745
    %v1158 = vpop.f32.mrf.mxu0
    %v1159 = vadd.f32 %v1046, %v1158
    %1160 = vmatmul.f32.gmra.mxu0 %v747
    %v1161 = vpop.f32.mrf.mxu0
    %v1162 = vadd.f32 %v1049, %v1161
    %1163 = vmatmul.f32.gmra.mxu0 %v749
    %v1164 = vpop.f32.mrf.mxu0
    %v1165 = vadd.f32 %v1052, %v1164
    %1166 = vmatmul.f32.gmra.mxu0 %v751
    %v1167 = vpop.f32.mrf.mxu0
    %v1168 = vadd.f32 %v1055, %v1167
    %1169 = vdwg.mxu0
    %1170 = vmatpush.msra.mxu0 %v655
    %1171 = vmatpush.msra.mxu0 %v653
    %1172 = vmatpush.msra.mxu0 %v651
    %1173 = vmatpush.msra.mxu0 %v649
    %1174 = vmatpush.msra.mxu0 %v647
    %1175 = vmatpush.msra.mxu0 %v645
    %1176 = vmatpush.msra.mxu0 %v643
    %1177 = vmatpush.msra.mxu0 %v641
    %1178 = vmatpush.msra.mxu0 %v639
    %1179 = vmatpush.msra.mxu0 %v637
    %1180 = vmatpush.msra.mxu0 %v635
    %1181 = vmatpush.msra.mxu0 %v633
    %1182 = vmatpush.msra.mxu0 %v631
    %1183 = vmatpush.msra.mxu0 %v629
    %1184 = vmatpush.msra.mxu0 %v627
    %1185 = vmatpush.msra.mxu0 %v625
    %1186 = vmatmul.f32.gmra.mxu0 %v688
    %v1187 = vpop.f32.mrf.mxu0
    %v1188 = vadd.f32 %v787, %v1187
    %1189 = vmatmul.f32.gmra.mxu0 %v690
    %v1190 = vpop.f32.mrf.mxu0
    %v1191 = vadd.f32 %v792, %v1190
    %1192 = vmatmul.f32.gmra.mxu0 %v692
    %v1193 = vpop.f32.mrf.mxu0
    %v1194 = vadd.f32 %v797, %v1193
    %1195 = vmatmul.f32.gmra.mxu0 %v694
    %v1196 = vpop.f32.mrf.mxu0
    %v1197 = vadd.f32 %v802, %v1196
    %1198 = vmatmul.f32.gmra.mxu0 %v696
    %v1199 = vpop.f32.mrf.mxu0
    %v1200 = vadd.f32 %v807, %v1199
    %1201 = vmatmul.f32.gmra.mxu0 %v698
    %v1202 = vpop.f32.mrf.mxu0
    %v1203 = vadd.f32 %v812, %v1202
    %1204 = vmatmul.f32.gmra.mxu0 %v700
    %v1205 = vpop.f32.mrf.mxu0
    %v1206 = vadd.f32 %v817, %v1205
    %1207 = vmatmul.f32.gmra.mxu0 %v702
    %v1208 = vpop.f32.mrf.mxu0
    %v1209 = vadd.f32 %v822, %v1208
    %1210 = vmatmul.f32.gmra.mxu0 %v704
    %v1211 = vpop.f32.mrf.mxu0
    %v1212 = vadd.f32 %v827, %v1211
    %1213 = vmatmul.f32.gmra.mxu0 %v706
    %v1214 = vpop.f32.mrf.mxu0
    %v1215 = vadd.f32 %v832, %v1214
    %1216 = vmatmul.f32.gmra.mxu0 %v708
    %v1217 = vpop.f32.mrf.mxu0
    %v1218 = vadd.f32 %v837, %v1217
    %1219 = vmatmul.f32.gmra.mxu0 %v710
    %v1220 = vpop.f32.mrf.mxu0
    %v1221 = vadd.f32 %v842, %v1220
    %1222 = vmatmul.f32.gmra.mxu0 %v712
    %v1223 = vpop.f32.mrf.mxu0
    %v1224 = vadd.f32 %v847, %v1223
    %1225 = vmatmul.f32.gmra.mxu0 %v714
    %v1226 = vpop.f32.mrf.mxu0
    %v1227 = vadd.f32 %v852, %v1226
    %1228 = vmatmul.f32.gmra.mxu0 %v716
    %v1229 = vpop.f32.mrf.mxu0
    %v1230 = vadd.f32 %v857, %v1229
    %1231 = vmatmul.f32.gmra.mxu0 %v718
    %v1232 = vpop.f32.mrf.mxu0
    %v1233 = vadd.f32 %v862, %v1232
    %1234 = vmatmul.f32.gmra.mxu0 %v720
    %v1235 = vpop.f32.mrf.mxu0
    %v1236 = vadd.f32 %v867, %v1235
    %1237 = vmatmul.f32.gmra.mxu0 %v722
    %v1238 = vpop.f32.mrf.mxu0
    %v1239 = vadd.f32 %v872, %v1238
    %1240 = vmatmul.f32.gmra.mxu0 %v724
    %v1241 = vpop.f32.mrf.mxu0
    %v1242 = vadd.f32 %v877, %v1241
    %1243 = vmatmul.f32.gmra.mxu0 %v726
    %v1244 = vpop.f32.mrf.mxu0
    %v1245 = vadd.f32 %v882, %v1244
    %1246 = vmatmul.f32.gmra.mxu0 %v728
    %v1247 = vpop.f32.mrf.mxu0
    %v1248 = vadd.f32 %v887, %v1247
    %1249 = vmatmul.f32.gmra.mxu0 %v730
    %v1250 = vpop.f32.mrf.mxu0
    %v1251 = vadd.f32 %v892, %v1250
    %1252 = vmatmul.f32.gmra.mxu0 %v732
    %v1253 = vpop.f32.mrf.mxu0
    %v1254 = vadd.f32 %v897, %v1253
    %1255 = vmatmul.f32.gmra.mxu0 %v734
    %v1256 = vpop.f32.mrf.mxu0
    %v1257 = vadd.f32 %v902, %v1256
    %1258 = vmatmul.f32.gmra.mxu0 %v736
    %v1259 = vpop.f32.mrf.mxu0
    %v1260 = vadd.f32 %v907, %v1259
    %1261 = vmatmul.f32.gmra.mxu0 %v738
    %v1262 = vpop.f32.mrf.mxu0
    %v1263 = vadd.f32 %v912, %v1262
    %1264 = vmatmul.f32.gmra.mxu0 %v740
    %v1265 = vpop.f32.mrf.mxu0
    %v1266 = vadd.f32 %v917, %v1265
    %1267 = vmatmul.f32.gmra.mxu0 %v742
    %v1268 = vpop.f32.mrf.mxu0
    %v1269 = vadd.f32 %v922, %v1268
    %1270 = vmatmul.f32.gmra.mxu0 %v744
    %v1271 = vpop.f32.mrf.mxu0
    %v1272 = vadd.f32 %v927, %v1271
    %1273 = vmatmul.f32.gmra.mxu0 %v746
    %v1274 = vpop.f32.mrf.mxu0
    %v1275 = vadd.f32 %v932, %v1274
    %1276 = vmatmul.f32.gmra.mxu0 %v748
    %v1277 = vpop.f32.mrf.mxu0
    %v1278 = vadd.f32 %v937, %v1277
    %1279 = vmatmul.f32.gmra.mxu0 %v750
    %v1280 = vpop.f32.mrf.mxu0
    %v1281 = vadd.f32 %v942, %v1280
    %1282 = vdwg.mxu0
    %1283 = vmatpush.msra.mxu0 %v687
    %1284 = vmatpush.msra.mxu0 %v685
    %1285 = vmatpush.msra.mxu0 %v683
    %1286 = vmatpush.msra.mxu0 %v681
    %1287 = vmatpush.msra.mxu0 %v679
    %1288 = vmatpush.msra.mxu0 %v677
    %1289 = vmatpush.msra.mxu0 %v675
    %1290 = vmatpush.msra.mxu0 %v673
    %1291 = vmatpush.msra.mxu0 %v671
    %1292 = vmatpush.msra.mxu0 %v669
    %1293 = vmatpush.msra.mxu0 %v667
    %1294 = vmatpush.msra.mxu0 %v665
    %1295 = vmatpush.msra.mxu0 %v663
    %1296 = vmatpush.msra.mxu0 %v661
    %1297 = vmatpush.msra.mxu0 %v659
    %1298 = vmatpush.msra.mxu0 %v657
    %1299 = vmatmul.f32.gmra.mxu0 %v689
    %v1300 = vpop.f32.mrf.mxu0
    %v1301 = vadd.f32 %v1188, %v1300
    %1302 = vmatmul.f32.gmra.mxu0 %v691
    %v1303 = vpop.f32.mrf.mxu0
    %v1304 = vadd.f32 %v1191, %v1303
    %1305 = vmatmul.f32.gmra.mxu0 %v693
    %v1306 = vpop.f32.mrf.mxu0
    %v1307 = vadd.f32 %v1194, %v1306
    %1308 = vmatmul.f32.gmra.mxu0 %v695
    %v1309 = vpop.f32.mrf.mxu0
    %v1310 = vadd.f32 %v1197, %v1309
    %1311 = vmatmul.f32.gmra.mxu0 %v697
    %v1312 = vpop.f32.mrf.mxu0
    %v1313 = vadd.f32 %v1200, %v1312
    %1314 = vmatmul.f32.gmra.mxu0 %v699
    %v1315 = vpop.f32.mrf.mxu0
    %v1316 = vadd.f32 %v1203, %v1315
    %1317 = vmatmul.f32.gmra.mxu0 %v701
    %v1318 = vpop.f32.mrf.mxu0
    %v1319 = vadd.f32 %v1206, %v1318
    %1320 = vmatmul.f32.gmra.mxu0 %v703
    %v1321 = vpop.f32.mrf.mxu0
    %v1322 = vadd.f32 %v1209, %v1321
    %1323 = vmatmul.f32.gmra.mxu0 %v705
    %v1324 = vpop.f32.mrf.mxu0
    %v1325 = vadd.f32 %v1212, %v1324
    %1326 = vmatmul.f32.gmra.mxu0 %v707
    %v1327 = vpop.f32.mrf.mxu0
    %v1328 = vadd.f32 %v1215, %v1327
    %1329 = vmatmul.f32.gmra.mxu0 %v709
    %v1330 = vpop.f32.mrf.mxu0
    %v1331 = vadd.f32 %v1218, %v1330
    %1332 = vmatmul.f32.gmra.mxu0 %v711
    %v1333 = vpop.f32.mrf.mxu0
    %v1334 = vadd.f32 %v1221, %v1333
    %1335 = vmatmul.f32.gmra.mxu0 %v713
    %v1336 = vpop.f32.mrf.mxu0
    %v1337 = vadd.f32 %v1224, %v1336
    %1338 = vmatmul.f32.gmra.mxu0 %v715
    %v1339 = vpop.f32.mrf.mxu0
    %v1340 = vadd.f32 %v1227, %v1339
    %1341 = vmatmul.f32.gmra.mxu0 %v717
    %v1342 = vpop.f32.mrf.mxu0
    %v1343 = vadd.f32 %v1230, %v1342
    %1344 = vmatmul.f32.gmra.mxu0 %v719
    %v1345 = vpop.f32.mrf.mxu0
    %v1346 = vadd.f32 %v1233, %v1345
    %1347 = vmatmul.f32.gmra.mxu0 %v721
    %v1348 = vpop.f32.mrf.mxu0
    %v1349 = vadd.f32 %v1236, %v1348
    %1350 = vmatmul.f32.gmra.mxu0 %v723
    %v1351 = vpop.f32.mrf.mxu0
    %v1352 = vadd.f32 %v1239, %v1351
    %1353 = vmatmul.f32.gmra.mxu0 %v725
    %v1354 = vpop.f32.mrf.mxu0
    %v1355 = vadd.f32 %v1242, %v1354
    %1356 = vmatmul.f32.gmra.mxu0 %v727
    %v1357 = vpop.f32.mrf.mxu0
    %v1358 = vadd.f32 %v1245, %v1357
    %1359 = vmatmul.f32.gmra.mxu0 %v729
    %v1360 = vpop.f32.mrf.mxu0
    %v1361 = vadd.f32 %v1248, %v1360
    %1362 = vmatmul.f32.gmra.mxu0 %v731
    %v1363 = vpop.f32.mrf.mxu0
    %v1364 = vadd.f32 %v1251, %v1363
    %1365 = vmatmul.f32.gmra.mxu0 %v733
    %v1366 = vpop.f32.mrf.mxu0
    %v1367 = vadd.f32 %v1254, %v1366
    %1368 = vmatmul.f32.gmra.mxu0 %v735
    %v1369 = vpop.f32.mrf.mxu0
    %v1370 = vadd.f32 %v1257, %v1369
    %1371 = vmatmul.f32.gmra.mxu0 %v737
    %v1372 = vpop.f32.mrf.mxu0
    %v1373 = vadd.f32 %v1260, %v1372
    %1374 = vmatmul.f32.gmra.mxu0 %v739
    %v1375 = vpop.f32.mrf.mxu0
    %v1376 = vadd.f32 %v1263, %v1375
    %1377 = vmatmul.f32.gmra.mxu0 %v741
    %v1378 = vpop.f32.mrf.mxu0
    %v1379 = vadd.f32 %v1266, %v1378
    %1380 = vmatmul.f32.gmra.mxu0 %v743
    %v1381 = vpop.f32.mrf.mxu0
    %v1382 = vadd.f32 %v1269, %v1381
    %1383 = vmatmul.f32.gmra.mxu0 %v745
    %v1384 = vpop.f32.mrf.mxu0
    %v1385 = vadd.f32 %v1272, %v1384
    %1386 = vmatmul.f32.gmra.mxu0 %v747
    %v1387 = vpop.f32.mrf.mxu0
    %v1388 = vadd.f32 %v1275, %v1387
    %1389 = vmatmul.f32.gmra.mxu0 %v749
    %v1390 = vpop.f32.mrf.mxu0
    %v1391 = vadd.f32 %v1278, %v1390
    %1392 = vmatmul.f32.gmra.mxu0 %v751
    %v1393 = vpop.f32.mrf.mxu0
    %v1394 = vadd.f32 %v1281, %v1393
    %1395 = vdwg.mxu0
    %v1396 = vmax.f32 %v1075, 0.0
    %v1397 = vmax.f32 %v1301, 0.0
    %v1398 = vmax.f32 %v1078, 0.0
    %v1399 = vmax.f32 %v1304, 0.0
    %v1400 = vmax.f32 %v1081, 0.0
    %v1401 = vmax.f32 %v1307, 0.0
    %v1402 = vmax.f32 %v1084, 0.0
    %v1403 = vmax.f32 %v1310, 0.0
    %v1404 = vmax.f32 %v1087, 0.0
    %v1405 = vmax.f32 %v1313, 0.0
    %v1406 = vmax.f32 %v1090, 0.0
    %v1407 = vmax.f32 %v1316, 0.0
    %v1408 = vmax.f32 %v1093, 0.0
    %v1409 = vmax.f32 %v1319, 0.0
    %v1410 = vmax.f32 %v1096, 0.0
    %v1411 = vmax.f32 %v1322, 0.0
    %v1412 = vmax.f32 %v1099, 0.0
    %v1413 = vmax.f32 %v1325, 0.0
    %v1414 = vmax.f32 %v1102, 0.0
    %v1415 = vmax.f32 %v1328, 0.0
    %v1416 = vmax.f32 %v1105, 0.0
    %v1417 = vmax.f32 %v1331, 0.0
    %v1418 = vmax.f32 %v1108, 0.0
    %v1419 = vmax.f32 %v1334, 0.0
    %v1420 = vmax.f32 %v1111, 0.0
    %v1421 = vmax.f32 %v1337, 0.0
    %v1422 = vmax.f32 %v1114, 0.0
    %v1423 = vmax.f32 %v1340, 0.0
    %v1424 = vmax.f32 %v1117, 0.0
    %v1425 = vmax.f32 %v1343, 0.0
    %v1426 = vmax.f32 %v1120, 0.0
    %v1427 = vmax.f32 %v1346, 0.0
    %v1428 = vmax.f32 %v1123, 0.0
    %v1429 = vmax.f32 %v1349, 0.0
    %v1430 = vmax.f32 %v1126, 0.0
    %v1431 = vmax.f32 %v1352, 0.0
    %v1432 = vmax.f32 %v1129, 0.0
    %v1433 = vmax.f32 %v1355, 0.0
    %v1434 = vmax.f32 %v1132, 0.0
    %v1435 = vmax.f32 %v1358, 0.0
    %v1436 = vmax.f32 %v1135, 0.0
    %v1437 = vmax.f32 %v1361, 0.0
    %v1438 = vmax.f32 %v1138, 0.0
    %v1439 = vmax.f32 %v1364, 0.0
    %v1440 = vmax.f32 %v1141, 0.0
    %v1441 = vmax.f32 %v1367, 0.0
    %v1442 = vmax.f32 %v1144, 0.0
    %v1443 = vmax.f32 %v1370, 0.0
    %v1444 = vmax.f32 %v1147, 0.0
    %v1445 = vmax.f32 %v1373, 0.0
    %v1446 = vmax.f32 %v1150, 0.0
    %v1447 = vmax.f32 %v1376, 0.0
    %v1448 = vmax.f32 %v1153, 0.0
    %v1449 = vmax.f32 %v1379, 0.0
    %v1450 = vmax.f32 %v1156, 0.0
    %v1451 = vmax.f32 %v1382, 0.0
    %v1452 = vmax.f32 %v1159, 0.0
    %v1453 = vmax.f32 %v1385, 0.0
    %v1454 = vmax.f32 %v1162, 0.0
    %v1455 = vmax.f32 %v1388, 0.0
    %v1456 = vmax.f32 %v1165, 0.0
    %v1457 = vmax.f32 %v1391, 0.0
    %v1458 = vmax.f32 %v1168, 0.0
    %v1459 = vmax.f32 %v1394, 0.0
    %v1460 = vld [vmem:[%s5] sm:$0xff]
    %v1461 = vld [vmem:[%s5 + $0x8] sm:$0xff]
    %v1462 = vld [vmem:[%s5 + $0x10] sm:$0xff]
    %v1463 = vld [vmem:[%s5 + $0x18] sm:$0xff]
    %v1464 = vld [vmem:[%s5 + $0x20] sm:$0xff]
    %v1465 = vld [vmem:[%s5 + $0x28] sm:$0xff]
    %v1466 = vld [vmem:[%s5 + $0x30] sm:$0xff]
    %v1467 = vld [vmem:[%s5 + $0x38] sm:$0xff]
    %v1468 = vld [vmem:[%s5 + $0x40] sm:$0xff]
    %v1469 = vld [vmem:[%s5 + $0x48] sm:$0xff]
    %v1470 = vld [vmem:[%s5 + $0x50] sm:$0xff]
    %v1471 = vld [vmem:[%s5 + $0x58] sm:$0xff]
    %v1472 = vld [vmem:[%s5 + $0x60] sm:$0xff]
    %v1473 = vld [vmem:[%s5 + $0x68] sm:$0xff]
    %v1474 = vld [vmem:[%s5 + $0x70] sm:$0xff]
    %v1475 = vld [vmem:[%s5 + $0x78] sm:$0xff]
    %v1476 = vld [vmem:[%s5 + $0x80] sm:$0xff]
    %v1477 = vld [vmem:[%s5 + $0x88] sm:$0xff]
    %v1478 = vld [vmem:[%s5 + $0x90] sm:$0xff]
    %v1479 = vld [vmem:[%s5 + $0x98] sm:$0xff]
    %v1480 = vld [vmem:[%s5 + $0xa0] sm:$0xff]
    %v1481 = vld [vmem:[%s5 + $0xa8] sm:$0xff]
    %v1482 = vld [vmem:[%s5 + $0xb0] sm:$0xff]
    %v1483 = vld [vmem:[%s5 + $0xb8] sm:$0xff]
    %v1484 = vld [vmem:[%s5 + $0xc0] sm:$0xff]
    %v1485 = vld [vmem:[%s5 + $0xc8] sm:$0xff]
    %v1486 = vld [vmem:[%s5 + $0xd0] sm:$0xff]
    %v1487 = vld [vmem:[%s5 + $0xd8] sm:$0xff]
    %v1488 = vld [vmem:[%s5 + $0xe0] sm:$0xff]
    %v1489 = vld [vmem:[%s5 + $0xe8] sm:$0xff]
    %v1490 = vld [vmem:[%s5 + $0xf0] sm:$0xff]
    %v1491 = vld [vmem:[%s5 + $0xf8] sm:$0xff]
    %v1492 = vld [vmem:[%s6] sm:$0xff]
    %v1493 = vld [vmem:[%s6 + $0x8] sm:$0xff]
    %v1494 = vld [vmem:[%s6 + $0x10] sm:$0xff]
    %v1495 = vld [vmem:[%s6 + $0x18] sm:$0xff]
    %v1496 = vld [vmem:[%s6 + $0x20] sm:$0xff]
    %v1497 = vld [vmem:[%s6 + $0x28] sm:$0xff]
    %v1498 = vld [vmem:[%s6 + $0x30] sm:$0xff]
    %v1499 = vld [vmem:[%s6 + $0x38] sm:$0xff]
    %v1500 = vld [vmem:[%s6 + $0x40] sm:$0xff]
    %v1501 = vld [vmem:[%s6 + $0x48] sm:$0xff]
    %v1502 = vld [vmem:[%s6 + $0x50] sm:$0xff]
    %v1503 = vld [vmem:[%s6 + $0x58] sm:$0xff]
    %v1504 = vld [vmem:[%s6 + $0x60] sm:$0xff]
    %v1505 = vld [vmem:[%s6 + $0x68] sm:$0xff]
    %v1506 = vld [vmem:[%s6 + $0x70] sm:$0xff]
    %v1507 = vld [vmem:[%s6 + $0x78] sm:$0xff]
    %1509 = vset.pattern.permute.xlu0 0
    %1510 = vperm.xlu0 %1509, %v1492
    %v1511 = vpop.permute.xlu0 %1510
    %1514 = vset.pattern.permute.xlu0 0
    %1515 = vperm.xlu0 %1514, %v1493
    %v1516 = vpop.permute.xlu0 %1515
    %1519 = vset.pattern.permute.xlu0 0
    %1520 = vperm.xlu0 %1519, %v1494
    %v1521 = vpop.permute.xlu0 %1520
    %1524 = vset.pattern.permute.xlu0 0
    %1525 = vperm.xlu0 %1524, %v1495
    %v1526 = vpop.permute.xlu0 %1525
    %1529 = vset.pattern.permute.xlu0 0
    %1530 = vperm.xlu0 %1529, %v1496
    %v1531 = vpop.permute.xlu0 %1530
    %1534 = vset.pattern.permute.xlu0 0
    %1535 = vperm.xlu0 %1534, %v1497
    %v1536 = vpop.permute.xlu0 %1535
    %1539 = vset.pattern.permute.xlu0 0
    %1540 = vperm.xlu0 %1539, %v1498
    %v1541 = vpop.permute.xlu0 %1540
    %1544 = vset.pattern.permute.xlu0 0
    %1545 = vperm.xlu0 %1544, %v1499
    %v1546 = vpop.permute.xlu0 %1545
    %1549 = vset.pattern.permute.xlu0 0
    %1550 = vperm.xlu0 %1549, %v1500
    %v1551 = vpop.permute.xlu0 %1550
    %1554 = vset.pattern.permute.xlu0 0
    %1555 = vperm.xlu0 %1554, %v1501
    %v1556 = vpop.permute.xlu0 %1555
    %1559 = vset.pattern.permute.xlu0 0
    %1560 = vperm.xlu0 %1559, %v1502
    %v1561 = vpop.permute.xlu0 %1560
    %1564 = vset.pattern.permute.xlu0 0
    %1565 = vperm.xlu0 %1564, %v1503
    %v1566 = vpop.permute.xlu0 %1565
    %1569 = vset.pattern.permute.xlu0 0
    %1570 = vperm.xlu0 %1569, %v1504
    %v1571 = vpop.permute.xlu0 %1570
    %1574 = vset.pattern.permute.xlu0 0
    %1575 = vperm.xlu0 %1574, %v1505
    %v1576 = vpop.permute.xlu0 %1575
    %1579 = vset.pattern.permute.xlu0 0
    %1580 = vperm.xlu0 %1579, %v1506
    %v1581 = vpop.permute.xlu0 %1580
    %1584 = vset.pattern.permute.xlu0 0
    %1585 = vperm.xlu0 %1584, %v1507
    %v1586 = vpop.permute.xlu0 %1585
    %1588 = vmatpush.msra.mxu0 %v1426
    %1589 = vmatpush.msra.mxu0 %v1424
    %1590 = vmatpush.msra.mxu0 %v1422
    %1591 = vmatpush.msra.mxu0 %v1420
    %1592 = vmatpush.msra.mxu0 %v1418
    %1593 = vmatpush.msra.mxu0 %v1416
    %1594 = vmatpush.msra.mxu0 %v1414
    %1595 = vmatpush.msra.mxu0 %v1412
    %1596 = vmatpush.msra.mxu0 %v1410
    %1597 = vmatpush.msra.mxu0 %v1408
    %1598 = vmatpush.msra.mxu0 %v1406
    %1599 = vmatpush.msra.mxu0 %v1404
    %1600 = vmatpush.msra.mxu0 %v1402
    %1601 = vmatpush.msra.mxu0 %v1400
    %1602 = vmatpush.msra.mxu0 %v1398
    %1603 = vmatpush.msra.mxu0 %v1396
    %1604 = vmatmul.f32.gmra.mxu0 %v1460
    %v1605 = vpop.f32.mrf.mxu0
    %v1606 = vadd.f32 %v1511, %v1605
    %1607 = vmatmul.f32.gmra.mxu0 %v1462
    %v1608 = vpop.f32.mrf.mxu0
    %v1609 = vadd.f32 %v1516, %v1608
    %1610 = vmatmul.f32.gmra.mxu0 %v1464
    %v1611 = vpop.f32.mrf.mxu0
    %v1612 = vadd.f32 %v1521, %v1611
    %1613 = vmatmul.f32.gmra.mxu0 %v1466
    %v1614 = vpop.f32.mrf.mxu0
    %v1615 = vadd.f32 %v1526, %v1614
    %1616 = vmatmul.f32.gmra.mxu0 %v1468
    %v1617 = vpop.f32.mrf.mxu0
    %v1618 = vadd.f32 %v1531, %v1617
    %1619 = vmatmul.f32.gmra.mxu0 %v1470
    %v1620 = vpop.f32.mrf.mxu0
    %v1621 = vadd.f32 %v1536, %v1620
    %1622 = vmatmul.f32.gmra.mxu0 %v1472
    %v1623 = vpop.f32.mrf.mxu0
    %v1624 = vadd.f32 %v1541, %v1623
    %1625 = vmatmul.f32.gmra.mxu0 %v1474
    %v1626 = vpop.f32.mrf.mxu0
    %v1627 = vadd.f32 %v1546, %v1626
    %1628 = vmatmul.f32.gmra.mxu0 %v1476
    %v1629 = vpop.f32.mrf.mxu0
    %v1630 = vadd.f32 %v1551, %v1629
    %1631 = vmatmul.f32.gmra.mxu0 %v1478
    %v1632 = vpop.f32.mrf.mxu0
    %v1633 = vadd.f32 %v1556, %v1632
    %1634 = vmatmul.f32.gmra.mxu0 %v1480
    %v1635 = vpop.f32.mrf.mxu0
    %v1636 = vadd.f32 %v1561, %v1635
    %1637 = vmatmul.f32.gmra.mxu0 %v1482
    %v1638 = vpop.f32.mrf.mxu0
    %v1639 = vadd.f32 %v1566, %v1638
    %1640 = vmatmul.f32.gmra.mxu0 %v1484
    %v1641 = vpop.f32.mrf.mxu0
    %v1642 = vadd.f32 %v1571, %v1641
    %1643 = vmatmul.f32.gmra.mxu0 %v1486
    %v1644 = vpop.f32.mrf.mxu0
    %v1645 = vadd.f32 %v1576, %v1644
    %1646 = vmatmul.f32.gmra.mxu0 %v1488
    %v1647 = vpop.f32.mrf.mxu0
    %v1648 = vadd.f32 %v1581, %v1647
    %1649 = vmatmul.f32.gmra.mxu0 %v1490
    %v1650 = vpop.f32.mrf.mxu0
    %v1651 = vadd.f32 %v1586, %v1650
    %1652 = vdwg.mxu0
    %1653 = vmatpush.msra.mxu0 %v1458
    %1654 = vmatpush.msra.mxu0 %v1456
    %1655 = vmatpush.msra.mxu0 %v1454
    %1656 = vmatpush.msra.mxu0 %v1452
    %1657 = vmatpush.msra.mxu0 %v1450
    %1658 = vmatpush.msra.mxu0 %v1448
    %1659 = vmatpush.msra.mxu0 %v1446
    %1660 = vmatpush.msra.mxu0 %v1444
    %1661 = vmatpush.msra.mxu0 %v1442
    %1662 = vmatpush.msra.mxu0 %v1440
    %1663 = vmatpush.msra.mxu0 %v1438
    %1664 = vmatpush.msra.mxu0 %v1436
    %1665 = vmatpush.msra.mxu0 %v1434
    %1666 = vmatpush.msra.mxu0 %v1432
    %1667 = vmatpush.msra.mxu0 %v1430
    %1668 = vmatpush.msra.mxu0 %v1428
    %1669 = vmatmul.f32.gmra.mxu0 %v1461
    %v1670 = vpop.f32.mrf.mxu0
    %v1671 = vadd.f32 %v1606, %v1670
    %1672 = vmatmul.f32.gmra.mxu0 %v1463
    %v1673 = vpop.f32.mrf.mxu0
    %v1674 = vadd.f32 %v1609, %v1673
    %1675 = vmatmul.f32.gmra.mxu0 %v1465
    %v1676 = vpop.f32.mrf.mxu0
    %v1677 = vadd.f32 %v1612, %v1676
    %1678 = vmatmul.f32.gmra.mxu0 %v1467
    %v1679 = vpop.f32.mrf.mxu0
    %v1680 = vadd.f32 %v1615, %v1679
    %1681 = vmatmul.f32.gmra.mxu0 %v1469
    %v1682 = vpop.f32.mrf.mxu0
    %v1683 = vadd.f32 %v1618, %v1682
    %1684 = vmatmul.f32.gmra.mxu0 %v1471
    %v1685 = vpop.f32.mrf.mxu0
    %v1686 = vadd.f32 %v1621, %v1685
    %1687 = vmatmul.f32.gmra.mxu0 %v1473
    %v1688 = vpop.f32.mrf.mxu0
    %v1689 = vadd.f32 %v1624, %v1688
    %1690 = vmatmul.f32.gmra.mxu0 %v1475
    %v1691 = vpop.f32.mrf.mxu0
    %v1692 = vadd.f32 %v1627, %v1691
    %1693 = vmatmul.f32.gmra.mxu0 %v1477
    %v1694 = vpop.f32.mrf.mxu0
    %v1695 = vadd.f32 %v1630, %v1694
    %1696 = vmatmul.f32.gmra.mxu0 %v1479
    %v1697 = vpop.f32.mrf.mxu0
    %v1698 = vadd.f32 %v1633, %v1697
    %1699 = vmatmul.f32.gmra.mxu0 %v1481
    %v1700 = vpop.f32.mrf.mxu0
    %v1701 = vadd.f32 %v1636, %v1700
    %1702 = vmatmul.f32.gmra.mxu0 %v1483
    %v1703 = vpop.f32.mrf.mxu0
    %v1704 = vadd.f32 %v1639, %v1703
    %1705 = vmatmul.f32.gmra.mxu0 %v1485
    %v1706 = vpop.f32.mrf.mxu0
    %v1707 = vadd.f32 %v1642, %v1706
    %1708 = vmatmul.f32.gmra.mxu0 %v1487
    %v1709 = vpop.f32.mrf.mxu0
    %v1710 = vadd.f32 %v1645, %v1709
    %1711 = vmatmul.f32.gmra.mxu0 %v1489
    %v1712 = vpop.f32.mrf.mxu0
    %v1713 = vadd.f32 %v1648, %v1712
    %1714 = vmatmul.f32.gmra.mxu0 %v1491
    %v1715 = vpop.f32.mrf.mxu0
    %v1716 = vadd.f32 %v1651, %v1715
    %1717 = vdwg.mxu0
    %1718 = vmatpush.msra.mxu0 %v1427
    %1719 = vmatpush.msra.mxu0 %v1425
    %1720 = vmatpush.msra.mxu0 %v1423
    %1721 = vmatpush.msra.mxu0 %v1421
    %1722 = vmatpush.msra.mxu0 %v1419
    %1723 = vmatpush.msra.mxu0 %v1417
    %1724 = vmatpush.msra.mxu0 %v1415
    %1725 = vmatpush.msra.mxu0 %v1413
    %1726 = vmatpush.msra.mxu0 %v1411
    %1727 = vmatpush.msra.mxu0 %v1409
    %1728 = vmatpush.msra.mxu0 %v1407
    %1729 = vmatpush.msra.mxu0 %v1405
    %1730 = vmatpush.msra.mxu0 %v1403
    %1731 = vmatpush.msra.mxu0 %v1401
    %1732 = vmatpush.msra.mxu0 %v1399
    %1733 = vmatpush.msra.mxu0 %v1397
    %1734 = vmatmul.f32.gmra.mxu0 %v1460
    %v1735 = vpop.f32.mrf.mxu0
    %v1736 = vadd.f32 %v1511, %v1735
    %1737 = vmatmul.f32.gmra.mxu0 %v1462
    %v1738 = vpop.f32.mrf.mxu0
    %v1739 = vadd.f32 %v1516, %v1738
    %1740 = vmatmul.f32.gmra.mxu0 %v1464
    %v1741 = vpop.f32.mrf.mxu0
    %v1742 = vadd.f32 %v1521, %v1741
    %1743 = vmatmul.f32.gmra.mxu0 %v1466
    %v1744 = vpop.f32.mrf.mxu0
    %v1745 = vadd.f32 %v1526, %v1744
    %1746 = vmatmul.f32.gmra.mxu0 %v1468
    %v1747 = vpop.f32.mrf.mxu0
    %v1748 = vadd.f32 %v1531, %v1747
    %1749 = vmatmul.f32.gmra.mxu0 %v1470
    %v1750 = vpop.f32.mrf.mxu0
    %v1751 = vadd.f32 %v1536, %v1750
    %1752 = vmatmul.f32.gmra.mxu0 %v1472
    %v1753 = vpop.f32.mrf.mxu0
    %v1754 = vadd.f32 %v1541, %v1753
    %1755 = vmatmul.f32.gmra.mxu0 %v1474
    %v1756 = vpop.f32.mrf.mxu0
    %v1757 = vadd.f32 %v1546, %v1756
    %1758 = vmatmul.f32.gmra.mxu0 %v1476
    %v1759 = vpop.f32.mrf.mxu0
    %v1760 = vadd.f32 %v1551, %v1759
    %1761 = vmatmul.f32.gmra.mxu0 %v1478
    %v1762 = vpop.f32.mrf.mxu0
    %v1763 = vadd.f32 %v1556, %v1762
    %1764 = vmatmul.f32.gmra.mxu0 %v1480
    %v1765 = vpop.f32.mrf.mxu0
    %v1766 = vadd.f32 %v1561, %v1765
    %1767 = vmatmul.f32.gmra.mxu0 %v1482
    %v1768 = vpop.f32.mrf.mxu0
    %v1769 = vadd.f32 %v1566, %v1768
    %1770 = vmatmul.f32.gmra.mxu0 %v1484
    %v1771 = vpop.f32.mrf.mxu0
    %v1772 = vadd.f32 %v1571, %v1771
    %1773 = vmatmul.f32.gmra.mxu0 %v1486
    %v1774 = vpop.f32.mrf.mxu0
    %v1775 = vadd.f32 %v1576, %v1774
    %1776 = vmatmul.f32.gmra.mxu0 %v1488
    %v1777 = vpop.f32.mrf.mxu0
    %v1778 = vadd.f32 %v1581, %v1777
    %1779 = vmatmul.f32.gmra.mxu0 %v1490
    %v1780 = vpop.f32.mrf.mxu0
    %v1781 = vadd.f32 %v1586, %v1780
    %1782 = vdwg.mxu0
    %1783 = vmatpush.msra.mxu0 %v1459
    %1784 = vmatpush.msra.mxu0 %v1457
    %1785 = vmatpush.msra.mxu0 %v1455
    %1786 = vmatpush.msra.mxu0 %v1453
    %1787 = vmatpush.msra.mxu0 %v1451
    %1788 = vmatpush.msra.mxu0 %v1449
    %1789 = vmatpush.msra.mxu0 %v1447
    %1790 = vmatpush.msra.mxu0 %v1445
    %1791 = vmatpush.msra.mxu0 %v1443
    %1792 = vmatpush.msra.mxu0 %v1441
    %1793 = vmatpush.msra.mxu0 %v1439
    %1794 = vmatpush.msra.mxu0 %v1437
    %1795 = vmatpush.msra.mxu0 %v1435
    %1796 = vmatpush.msra.mxu0 %v1433
    %1797 = vmatpush.msra.mxu0 %v1431
    %1798 = vmatpush.msra.mxu0 %v1429
    %1799 = vmatmul.f32.gmra.mxu0 %v1461
    %v1800 = vpop.f32.mrf.mxu0
    %v1801 = vadd.f32 %v1736, %v1800
    %1802 = vmatmul.f32.gmra.mxu0 %v1463
    %v1803 = vpop.f32.mrf.mxu0
    %v1804 = vadd.f32 %v1739, %v1803
    %1805 = vmatmul.f32.gmra.mxu0 %v1465
    %v1806 = vpop.f32.mrf.mxu0
    %v1807 = vadd.f32 %v1742, %v1806
    %1808 = vmatmul.f32.gmra.mxu0 %v1467
    %v1809 = vpop.f32.mrf.mxu0
    %v1810 = vadd.f32 %v1745, %v1809
    %1811 = vmatmul.f32.gmra.mxu0 %v1469
    %v1812 = vpop.f32.mrf.mxu0
    %v1813 = vadd.f32 %v1748, %v1812
    %1814 = vmatmul.f32.gmra.mxu0 %v1471
    %v1815 = vpop.f32.mrf.mxu0
    %v1816 = vadd.f32 %v1751, %v1815
    %1817 = vmatmul.f32.gmra.mxu0 %v1473
    %v1818 = vpop.f32.mrf.mxu0
    %v1819 = vadd.f32 %v1754, %v1818
    %1820 = vmatmul.f32.gmra.mxu0 %v1475
    %v1821 = vpop.f32.mrf.mxu0
    %v1822 = vadd.f32 %v1757, %v1821
    %1823 = vmatmul.f32.gmra.mxu0 %v1477
    %v1824 = vpop.f32.mrf.mxu0
    %v1825 = vadd.f32 %v1760, %v1824
    %1826 = vmatmul.f32.gmra.mxu0 %v1479
    %v1827 = vpop.f32.mrf.mxu0
    %v1828 = vadd.f32 %v1763, %v1827
    %1829 = vmatmul.f32.gmra.mxu0 %v1481
    %v1830 = vpop.f32.mrf.mxu0
    %v1831 = vadd.f32 %v1766, %v1830
    %1832 = vmatmul.f32.gmra.mxu0 %v1483
    %v1833 = vpop.f32.mrf.mxu0
    %v1834 = vadd.f32 %v1769, %v1833
    %1835 = vmatmul.f32.gmra.mxu0 %v1485
    %v1836 = vpop.f32.mrf.mxu0
    %v1837 = vadd.f32 %v1772, %v1836
    %1838 = vmatmul.f32.gmra.mxu0 %v1487
    %v1839 = vpop.f32.mrf.mxu0
    %v1840 = vadd.f32 %v1775, %v1839
    %1841 = vmatmul.f32.gmra.mxu0 %v1489
    %v1842 = vpop.f32.mrf.mxu0
    %v1843 = vadd.f32 %v1778, %v1842
    %1844 = vmatmul.f32.gmra.mxu0 %v1491
    %v1845 = vpop.f32.mrf.mxu0
    %v1846 = vadd.f32 %v1781, %v1845
    %1847 = vdwg.mxu0
    %v1848 = vmax.f32 %v1671, 0.0
    %v1849 = vmax.f32 %v1801, 0.0
    %v1850 = vmax.f32 %v1674, 0.0
    %v1851 = vmax.f32 %v1804, 0.0
    %v1852 = vmax.f32 %v1677, 0.0
    %v1853 = vmax.f32 %v1807, 0.0
    %v1854 = vmax.f32 %v1680, 0.0
    %v1855 = vmax.f32 %v1810, 0.0
    %v1856 = vmax.f32 %v1683, 0.0
    %v1857 = vmax.f32 %v1813, 0.0
    %v1858 = vmax.f32 %v1686, 0.0
    %v1859 = vmax.f32 %v1816, 0.0
    %v1860 = vmax.f32 %v1689, 0.0
    %v1861 = vmax.f32 %v1819, 0.0
    %v1862 = vmax.f32 %v1692, 0.0
    %v1863 = vmax.f32 %v1822, 0.0
    %v1864 = vmax.f32 %v1695, 0.0
    %v1865 = vmax.f32 %v1825, 0.0
    %v1866 = vmax.f32 %v1698, 0.0
    %v1867 = vmax.f32 %v1828, 0.0
    %v1868 = vmax.f32 %v1701, 0.0
    %v1869 = vmax.f32 %v1831, 0.0
    %v1870 = vmax.f32 %v1704, 0.0
    %v1871 = vmax.f32 %v1834, 0.0
    %v1872 = vmax.f32 %v1707, 0.0
    %v1873 = vmax.f32 %v1837, 0.0
    %v1874 = vmax.f32 %v1710, 0.0
    %v1875 = vmax.f32 %v1840, 0.0
    %v1876 = vmax.f32 %v1713, 0.0
    %v1877 = vmax.f32 %v1843, 0.0
    %v1878 = vmax.f32 %v1716, 0.0
    %v1879 = vmax.f32 %v1846, 0.0
    %v1880 = vld [vmem:[%s7] sm:$0xff]
    %v1881 = vld [vmem:[%s7 + $0x8] sm:$0xff]
    %v1882 = vld [vmem:[%s7 + $0x10] sm:$0xff]
    %v1883 = vld [vmem:[%s7 + $0x18] sm:$0xff]
    %v1884 = vld [vmem:[%s7 + $0x20] sm:$0xff]
    %v1885 = vld [vmem:[%s7 + $0x28] sm:$0xff]
    %v1886 = vld [vmem:[%s7 + $0x30] sm:$0xff]
    %v1887 = vld [vmem:[%s7 + $0x38] sm:$0xff]
    %v1888 = vld [vmem:[%s7 + $0x40] sm:$0xff]
    %v1889 = vld [vmem:[%s7 + $0x48] sm:$0xff]
    %v1890 = vld [vmem:[%s7 + $0x50] sm:$0xff]
    %v1891 = vld [vmem:[%s7 + $0x58] sm:$0xff]
    %v1892 = vld [vmem:[%s7 + $0x60] sm:$0xff]
    %v1893 = vld [vmem:[%s7 + $0x68] sm:$0xff]
    %v1894 = vld [vmem:[%s7 + $0x70] sm:$0xff]
    %v1895 = vld [vmem:[%s7 + $0x78] sm:$0xff]
    %1897 = vset.pattern.permute.xlu0 0
    %1898 = vperm.xlu0 %1897, %v1880
    %v1899 = vpop.permute.xlu0 %1898
    %1902 = vset.pattern.permute.xlu0 0
    %1903 = vperm.xlu0 %1902, %v1881
    %v1904 = vpop.permute.xlu0 %1903
    %1907 = vset.pattern.permute.xlu0 0
    %1908 = vperm.xlu0 %1907, %v1882
    %v1909 = vpop.permute.xlu0 %1908
    %1912 = vset.pattern.permute.xlu0 0
    %1913 = vperm.xlu0 %1912, %v1883
    %v1914 = vpop.permute.xlu0 %1913
    %1917 = vset.pattern.permute.xlu0 0
    %1918 = vperm.xlu0 %1917, %v1884
    %v1919 = vpop.permute.xlu0 %1918
    %1922 = vset.pattern.permute.xlu0 0
    %1923 = vperm.xlu0 %1922, %v1885
    %v1924 = vpop.permute.xlu0 %1923
    %1927 = vset.pattern.permute.xlu0 0
    %1928 = vperm.xlu0 %1927, %v1886
    %v1929 = vpop.permute.xlu0 %1928
    %1932 = vset.pattern.permute.xlu0 0
    %1933 = vperm.xlu0 %1932, %v1887
    %v1934 = vpop.permute.xlu0 %1933
    %1937 = vset.pattern.permute.xlu0 0
    %1938 = vperm.xlu0 %1937, %v1888
    %v1939 = vpop.permute.xlu0 %1938
    %1942 = vset.pattern.permute.xlu0 0
    %1943 = vperm.xlu0 %1942, %v1889
    %v1944 = vpop.permute.xlu0 %1943
    %1947 = vset.pattern.permute.xlu0 0
    %1948 = vperm.xlu0 %1947, %v1890
    %v1949 = vpop.permute.xlu0 %1948
    %1952 = vset.pattern.permute.xlu0 0
    %1953 = vperm.xlu0 %1952, %v1891
    %v1954 = vpop.permute.xlu0 %1953
    %1957 = vset.pattern.permute.xlu0 0
    %1958 = vperm.xlu0 %1957, %v1892
    %v1959 = vpop.permute.xlu0 %1958
    %1962 = vset.pattern.permute.xlu0 0
    %1963 = vperm.xlu0 %1962, %v1893
    %v1964 = vpop.permute.xlu0 %1963
    %1967 = vset.pattern.permute.xlu0 0
    %1968 = vperm.xlu0 %1967, %v1894
    %v1969 = vpop.permute.xlu0 %1968
    %1972 = vset.pattern.permute.xlu0 0
    %1973 = vperm.xlu0 %1972, %v1895
    %v1974 = vpop.permute.xlu0 %1973
    %v1976 = vmul.f32 %v1848, %v1899
    %v1977 = vmul.f32 %v1849, %v1899
    %v1978 = vmul.f32 %v1850, %v1904
    %v1979 = vmul.f32 %v1851, %v1904
    %v1980 = vmul.f32 %v1852, %v1909
    %v1981 = vmul.f32 %v1853, %v1909
    %v1982 = vmul.f32 %v1854, %v1914
    %v1983 = vmul.f32 %v1855, %v1914
    %v1984 = vmul.f32 %v1856, %v1919
    %v1985 = vmul.f32 %v1857, %v1919
    %v1986 = vmul.f32 %v1858, %v1924
    %v1987 = vmul.f32 %v1859, %v1924
    %v1988 = vmul.f32 %v1860, %v1929
    %v1989 = vmul.f32 %v1861, %v1929
    %v1990 = vmul.f32 %v1862, %v1934
    %v1991 = vmul.f32 %v1863, %v1934
    %v1992 = vmul.f32 %v1864, %v1939
    %v1993 = vmul.f32 %v1865, %v1939
    %v1994 = vmul.f32 %v1866, %v1944
    %v1995 = vmul.f32 %v1867, %v1944
    %v1996 = vmul.f32 %v1868, %v1949
    %v1997 = vmul.f32 %v1869, %v1949
    %v1998 = vmul.f32 %v1870, %v1954
    %v1999 = vmul.f32 %v1871, %v1954
    %v2000 = vmul.f32 %v1872, %v1959
    %v2001 = vmul.f32 %v1873, %v1959
    %v2002 = vmul.f32 %v1874, %v1964
    %v2003 = vmul.f32 %v1875, %v1964
    %v2004 = vmul.f32 %v1876, %v1969
    %v2005 = vmul.f32 %v1877, %v1969
    %v2006 = vmul.f32 %v1878, %v1974
    %v2007 = vmul.f32 %v1879, %v1974
    %v2008 = vadd.f32 %v1976, %v1978
    %v2009 = vadd.f32 %v2008, %v1980
    %v2010 = vadd.f32 %v2009, %v1982
    %v2011 = vadd.f32 %v2010, %v1984
    %v2012 = vadd.f32 %v2011, %v1986
    %v2013 = vadd.f32 %v2012, %v1988
    %v2014 = vadd.f32 %v2013, %v1990
    %v2015 = vadd.f32 %v2014, %v1992
    %v2016 = vadd.f32 %v2015, %v1994
    %v2017 = vadd.f32 %v2016, %v1996
    %v2018 = vadd.f32 %v2017, %v1998
    %v2019 = vadd.f32 %v2018, %v2000
    %v2020 = vadd.f32 %v2019, %v2002
    %v2021 = vadd.f32 %v2020, %v2004
    %v2022 = vadd.f32 %v2021, %v2006
    %v2023 = vrot.slane %v2022, 4
    %v2024 = vadd.f32 %v2022, %v2023
    %v2025 = vrot.slane %v2024, 2
    %v2026 = vadd.f32 %v2024, %v2025
    %v2027 = vrot.slane %v2026, 1
    %v2028 = vadd.f32 %v2026, %v2027
    %v2029 = vadd.f32 %v1977, %v1979
    %v2030 = vadd.f32 %v2029, %v1981
    %v2031 = vadd.f32 %v2030, %v1983
    %v2032 = vadd.f32 %v2031, %v1985
    %v2033 = vadd.f32 %v2032, %v1987
    %v2034 = vadd.f32 %v2033, %v1989
    %v2035 = vadd.f32 %v2034, %v1991
    %v2036 = vadd.f32 %v2035, %v1993
    %v2037 = vadd.f32 %v2036, %v1995
    %v2038 = vadd.f32 %v2037, %v1997
    %v2039 = vadd.f32 %v2038, %v1999
    %v2040 = vadd.f32 %v2039, %v2001
    %v2041 = vadd.f32 %v2040, %v2003
    %v2042 = vadd.f32 %v2041, %v2005
    %v2043 = vadd.f32 %v2042, %v2007
    %v2044 = vrot.slane %v2043, 4
    %v2045 = vadd.f32 %v2043, %v2044
    %v2046 = vrot.slane %v2045, 2
    %v2047 = vadd.f32 %v2045, %v2046
    %v2048 = vrot.slane %v2047, 1
    %v2049 = vadd.f32 %v2047, %v2048
    %v2050 = vld [vmem:[#allocation2] sm:$0x1]
    %2052 = vset.pattern.permute.xlu0 0
    %2053 = vperm.xlu0 %2052, %v2050
    %v2054 = vpop.permute.xlu0 %2053
    %v2056 = vperm.slane %v2054, 0
    %v2057 = vadd.f32 %v2028, %v2056
    %v2058 = vadd.f32 %v2049, %v2056
    %v2061 = vrot.slane %v2058, 7
    %vm2062 = vcmask 1040384
    %v2063 = vsel %vm2062, %v2057, %v2061
    %v2065 = vlaneseq
    %vm2066 = vcmp.ge.s32.totalorder %v2065, 0
    %vm2067 = vcmp.lt.s32.totalorder %v2065, 256
    %vm2068 = vmand %vm2066, %vm2067
    %2069 = vst.msk [vmem:[#allocation4] sm:$0x3] %vm2068, %v2063
    // Predicated region
    $region76: #{hamiltonian_network_quadruped.1} parent=1 // pred_check
      _
    $region77: #{hamiltonian_network_quadruped.1} parent=1 // pred_check_branch
      %2071 = sbr.rel (0) target = $region79
    $region78: #{hamiltonian_network_quadruped.1} parent=1 // pred_region
      // Predicated region
      $region80: #{hamiltonian_network_quadruped.1} parent=78 // pred_check
        _
      $region81: #{hamiltonian_network_quadruped.1} parent=78 // pred_check_branch
        %2073 = sbr.rel (0) target = $region83
      $region82: #{hamiltonian_network_quadruped.1} parent=78 // pred_region
        // Predicated region
        $region84: #{hamiltonian_network_quadruped.1} parent=82 // pred_check
          _
        $region85: #{hamiltonian_network_quadruped.1} parent=82 // pred_check_branch
          %2075 = sbr.rel target = $region87
        $region86: #{hamiltonian_network_quadruped.1} parent=82 // pred_region
          // Predicated region
          $region99: #{hamiltonian_network_quadruped.1} parent=86 // pred_check
            _
          $region100: #{hamiltonian_network_quadruped.1} parent=86 // pred_check_branch
            %2091 = sbr.rel (0) target = $region102
          $region101: #{hamiltonian_network_quadruped.1} parent=86 // pred_region
            %s2093 = ssub.s32 2, 1
            loop: start=0, step=1, limit=1
            $region103: #{hamiltonian_network_quadruped.1} parent=101 // loop_pre_header
              _
            $region104: #{hamiltonian_network_quadruped.1} parent=101 // loop_header
              %s2095 = sphi 0, %s2099
              %p2096 = scmp.ge.s32.totalorder %s2095, 1
              %s2100 = sphi [#allocation4], [#allocation4]
              %s2101 = sphi %s9, %s9
            $region105: #{hamiltonian_network_quadruped.1} parent=101 // loop_header_branch
              %2098 = sbr.rel (%p2096) target = $region109
            $region106: #{hamiltonian_network_quadruped.1} parent=101 // loop_body
              %v2102 = vld [vmem:[%s2100] sm:%s2093]
              %2103 = vst [vmem:[%s2101] sm:%s2093] %v2102
            $region107: #{hamiltonian_network_quadruped.1} parent=101 // loop_footer
              %s2099 = sadd.s32 1, %s2095
            $region108: #{hamiltonian_network_quadruped.1} parent=101 // loop_footer_branch
              %2094 = sbr.rel target = $region104
            $region109: #{hamiltonian_network_quadruped.1} parent=101 // loop_exit
              _
          $region102: #{hamiltonian_network_quadruped.1} parent=86 // pred_fallthru
            _
        $region87: #{hamiltonian_network_quadruped.1} parent=82 // pred_fallthru
          _
        // Predicated region
        $region88: #{hamiltonian_network_quadruped.1} parent=82 // pred_check
          _
        $region89: #{hamiltonian_network_quadruped.1} parent=82 // pred_check_branch
          %2077 = sbr.rel (0) target = $region91
        $region90: #{hamiltonian_network_quadruped.1} parent=82 // pred_region
          %s2079 = ssub.s32 2, 1
          loop: start=0, step=1, limit=1
          $region92: #{hamiltonian_network_quadruped.1} parent=90 // loop_pre_header
            _
          $region93: #{hamiltonian_network_quadruped.1} parent=90 // loop_header
            %s2081 = sphi 0, %s2085
            %p2082 = scmp.ge.s32.totalorder %s2081, 1
            %s2086 = sphi [#allocation4], [#allocation4]
            %s2087 = sphi %s9, %s9
          $region94: #{hamiltonian_network_quadruped.1} parent=90 // loop_header_branch
            %2084 = sbr.rel (%p2082) target = $region98
          $region95: #{hamiltonian_network_quadruped.1} parent=90 // loop_body
            %v2088 = vld [vmem:[%s2086] sm:%s2079]
            %2089 = vst [vmem:[%s2087] sm:%s2079] %v2088
          $region96: #{hamiltonian_network_quadruped.1} parent=90 // loop_footer
            %s2085 = sadd.s32 1, %s2081
          $region97: #{hamiltonian_network_quadruped.1} parent=90 // loop_footer_branch
            %2080 = sbr.rel target = $region93
          $region98: #{hamiltonian_network_quadruped.1} parent=90 // loop_exit
            _
        $region91: #{hamiltonian_network_quadruped.1} parent=82 // pred_fallthru
          _
      $region83: #{hamiltonian_network_quadruped.1} parent=78 // pred_fallthru
        _
      %2104 = vnop
    $region79: #{hamiltonian_network_quadruped.1} parent=1 // pred_fallthru
      _
    // Predicated region
    $region110: #{hamiltonian_network_quadruped.1} parent=1 // pred_check
      _
    $region111: #{hamiltonian_network_quadruped.1} parent=1 // pred_check_branch
      %2106 = sbr.rel (0) target = $region113
    $region112: #{hamiltonian_network_quadruped.1} parent=1 // pred_region
      _
    $region113: #{hamiltonian_network_quadruped.1} parent=1 // pred_fallthru
      _

</llo_original>
